<compile_context>
chip_gen: v6e
topology: v6e:2x2x1
jax: 0.10.0
libtpu: 0.0.40
codegen_flags: <defaults>
</compile_context>

<pallas_src>
import functools
import math

import jax
import jax.numpy as jnp
from jax import lax
from jax.experimental import pallas as pl
from jax.experimental.pallas import tpu as pltpu

LOC_CNT = 8011
USER_CNT = 995


def _strnn_seq_kernel(coeffs_ref, x_ref, h0_ref, w_ref, out_ref, loc_scr,
                      *, T, L, H):
    """Fused T-step STRNN forward.

    coeffs_ref : (T*L, 4)  columns = [td_upper, td_lower, ld_upper, ld_lower]
    x_ref      : (T*L, H)  gathered location embeddings (row per visit)
    h0_ref     : (1, H)    initial hidden state (row form)
    w_ref      : (5, H, H) packed weights: [Wtu^T, Wtl^T, Wsu^T, Wsl^T, Wih^T]
    out_ref    : (T, H)    hidden state after each timestep
    loc_scr    : (T, H)    VMEM scratch for the per-timestep location vectors
    """
    co = coeffs_ref[...]                                   # (T*L, 4)
    a, b = co[:, 0:1], co[:, 1:2]
    c, d = co[:, 2:3], co[:, 3:4]
    inv_t = 1.0 / (a + b)                                  # (T*L, 1)
    inv_s = 1.0 / (c + d)
    alpha, beta = a * inv_t, b * inv_t
    gamma, delta = c * inv_s, d * inv_s

    x = x_ref[...]                                         # (T*L, H)
    w_tu = w_ref[0]                                        # Wtu^T  (H, H)
    w_tl = w_ref[1]                                        # Wtl^T
    w_su = w_ref[2]                                        # Wsu^T
    w_sl = w_ref[3]                                        # Wsl^T
    w_ih_t = w_ref[4]                                      # Wih^T

    # Stage 1 (hx-independent, batched over all T*L visited locations):
    #   t_i = x_i @ Ttd_i^T = alpha_i*(x_i @ Wtu^T) + beta_i*(x_i @ Wtl^T)
    t1 = (jnp.dot(alpha * x, w_tu, preferred_element_type=jnp.float32)
          + jnp.dot(beta * x, w_tl, preferred_element_type=jnp.float32))  # (T*L, H)

    # Stage 2 with the L-sum hoisted BEFORE the matmul (exact by linearity):
    #   loc_vec_t = (sum_i gamma_i t_i) @ Wsu^T + (sum_i delta_i t_i) @ Wsl^T
    gt = jnp.sum((gamma * t1).reshape(T, L, H), axis=1)    # (T, H)
    dt = jnp.sum((delta * t1).reshape(T, L, H), axis=1)    # (T, H)
    loc_scr[...] = (jnp.dot(gt, w_su, preferred_element_type=jnp.float32)
                    + jnp.dot(dt, w_sl, preferred_element_type=jnp.float32))

    # Serial hx recurrence — the only hx-dependent part.
    def step(tt, h):
        lv = loc_scr[pl.ds(tt, 1), :]                      # (1, H)
        usr = jnp.dot(h, w_ih_t, preferred_element_type=jnp.float32)
        h_new = jax.nn.sigmoid(lv + usr)                   # (1, H)
        out_ref[pl.ds(tt, 1), :] = h_new
        return h_new

    lax.fori_loop(0, T, step, h0_ref[...], unroll=True)


def prepare_strnn_params(params):
    """One-time prep: transpose + pack all five (H, H) weights into a single
    (5, H, H) slab so the per-call path has no transpose/concat HLOs."""
    w_slab = jnp.stack(
        [params["weight_th_upper"].T,
         params["weight_th_lower"].T,
         params["weight_sh_upper"].T,
         params["weight_sh_lower"].T,
         params["weight_ih"].T],
        axis=0).astype(jnp.float32)                        # (5, H, H)
    return {
        "w_slab": w_slab,
        "location_weight": params["location_weight"].astype(jnp.float32),
    }


@jax.jit
def strnn_forward_sequence(prep, td_upper, td_lower, ld_upper, ld_lower, loc, h0):
    """Fused T-step STRNN forward.

    td_*/ld_* : (T, L) float, loc : (T, L) int32, h0 : (H, 1).
    Returns (T, H, 1) — the hidden state after every timestep.
    """
    w_slab = prep["w_slab"]
    H = w_slab.shape[-1]
    T, L = loc.shape

    # Consolidated inputs: one coefficient table, one embedding gather for the
    # whole sequence, the initial hidden row, and the packed weight slab.
    coeffs = jnp.stack([td_upper, td_lower, ld_upper, ld_lower], axis=-1)
    coeffs = coeffs.reshape(T * L, 4).astype(jnp.float32)
    x_all = jnp.take(prep["location_weight"], loc.reshape(T * L), axis=0)
    h0_row = h0.reshape(1, H).astype(jnp.float32)

    vmem = pl.BlockSpec(memory_space=pltpu.MemorySpace.VMEM)
    kernel = functools.partial(_strnn_seq_kernel, T=T, L=L, H=H)

    h_all = pl.pallas_call(
        kernel,
        out_shape=jax.ShapeDtypeStruct((T, H), jnp.float32),
        in_specs=[vmem] * 4,
        out_specs=vmem,
        scratch_shapes=[pltpu.VMEM((T, H), jnp.float32)],
    )(coeffs, x_all, h0_row, w_slab)

    return h_all.reshape(T, H, 1)


@jax.jit
def strnn_cell_forward(prep, td_upper, td_lower, ld_upper, ld_lower, loc, hx):
    """Single-step STRNNCell.forward (original module API): hx (H,1) -> (H,1)."""
    h_all = strnn_forward_sequence(
        prep, td_upper[None], td_lower[None], ld_upper[None], ld_lower[None],
        loc[None], hx)
    return h_all[0]


def strnn_cell_reference(params, td_upper, td_lower, ld_upper, ld_lower, loc, hx):
    """Pure-JAX mirror of the PyTorch STRNNCell.forward for verification."""
    H = params["weight_ih"].shape[0]
    loc_emb = jnp.take(params["location_weight"], loc, axis=0)
    acc = jnp.zeros((H, 1), jnp.float32)
    for i in range(loc.shape[0]):
        ttd = (params["weight_th_upper"] * td_upper[i]
               + params["weight_th_lower"] * td_lower[i]) / (td_upper[i] + td_lower[i])
        sld = (params["weight_sh_upper"] * ld_upper[i]
               + params["weight_sh_lower"] * ld_lower[i]) / (ld_upper[i] + ld_lower[i])
        x = loc_emb[i].reshape(H, 1)
        acc = acc + sld @ (ttd @ x)
    usr = params["weight_ih"] @ hx
    return jax.nn.sigmoid(acc + usr)


if __name__ == "__main__":
    H = 32        # hidden_size
    T = 8         # timesteps fused into one pallas_call
    L = 8         # visited locations per step

    key = jax.random.PRNGKey(0)
    keys = jax.random.split(key, 13)
    stdv = 1.0 / math.sqrt(H)

    def uni(k, shape):
        return jax.random.uniform(k, shape, jnp.float32, -stdv, stdv)

    params = {
        "weight_ih":        uni(keys[0], (H, H)),
        "weight_th_upper":  uni(keys[1], (H, H)),
        "weight_th_lower":  uni(keys[2], (H, H)),
        "weight_sh_upper":  uni(keys[3], (H, H)),
        "weight_sh_lower":  uni(keys[4], (H, H)),
        "location_weight":  uni(keys[5], (LOC_CNT, H)),
        "permanet_weight":  uni(keys[6], (USER_CNT, H)),   # unused in forward
    }

    td_upper = jax.random.uniform(keys[7], (T, L), jnp.float32, 0.1, 5.0)
    td_lower = jax.random.uniform(keys[8], (T, L), jnp.float32, 0.1, 5.0)
    ld_upper = jax.random.uniform(keys[9], (T, L), jnp.float32, 0.1, 5.0)
    ld_lower = jax.random.uniform(keys[10], (T, L), jnp.float32, 0.1, 5.0)
    loc = jax.random.randint(keys[11], (T, L), 0, LOC_CNT, jnp.int32)
    h0 = jax.random.uniform(keys[12], (H, 1), jnp.float32, -stdv, stdv)

    prep = prepare_strnn_params(params)   # one-time weight transpose + packing

    # Fused multi-step forward: one pallas_call for all T timesteps.
    h_all = strnn_forward_sequence(prep, td_upper, td_lower, ld_upper, ld_lower,
                                   loc, h0)
    h_all = jax.block_until_ready(h_all)
    assert h_all.shape == (T, H, 1), h_all.shape

    # Verify against the exact PyTorch-cell math applied sequentially.
    h_ref = h0
    for t in range(T):
        h_ref = strnn_cell_reference(params, td_upper[t], td_lower[t],
                                     ld_upper[t], ld_lower[t], loc[t], h_ref)
        err = float(jnp.max(jnp.abs(h_all[t] - h_ref)))
        assert jnp.allclose(h_all[t], h_ref, rtol=1e-4, atol=1e-5), (t, err)

    # Single-cell API (original module forward) still works and matches.
    out1 = strnn_cell_forward(prep, td_upper[0], td_lower[0], ld_upper[0],
                              ld_lower[0], loc[0], h0)
    out1 = jax.block_until_ready(out1)
    ref1 = strnn_cell_reference(params, td_upper[0], td_lower[0], ld_upper[0],
                                ld_lower[0], loc[0], h0)
    assert out1.shape == (H, 1), out1.shape
    assert jnp.allclose(out1, ref1, rtol=1e-4, atol=1e-5), \
        float(jnp.max(jnp.abs(out1 - ref1)))

    print("KERNEL_OK")
</pallas_src>

<mosaic_0001>
module attributes {stable_mosaic.version = 11 : i64} {
  func.func @_strnn_seq_kernel(%arg0: memref<64x4xf32, #tpu.memory_space<vmem>>, %arg1: memref<64x32xf32, #tpu.memory_space<vmem>>, %arg2: memref<1x32xf32, #tpu.memory_space<vmem>>, %arg3: memref<5x32x32xf32, #tpu.memory_space<vmem>>, %arg4: memref<8x32xf32, #tpu.memory_space<vmem>>, %arg5: memref<8x32xf32, #tpu.memory_space<vmem>>) attributes {dimension_semantics = [], scalar_prefetch = 0 : i64, scratch_operands = 1 : i64, tpu.core_type = #tpu.core_type<tc>} {
    %c0 = arith.constant 0 : index
    %c0_0 = arith.constant 0 : index
    %0 = vector.load %arg0[%c0, %c0_0] : memref<64x4xf32, #tpu.memory_space<vmem>>, vector<64x4xf32>
    %1 = vector.extract_strided_slice %0 {offsets = [0, 0], sizes = [64, 1], strides = [1, 1]} : vector<64x4xf32> to vector<64x1xf32>
    %2 = vector.extract_strided_slice %0 {offsets = [0, 1], sizes = [64, 1], strides = [1, 1]} : vector<64x4xf32> to vector<64x1xf32>
    %3 = vector.extract_strided_slice %0 {offsets = [0, 2], sizes = [64, 1], strides = [1, 1]} : vector<64x4xf32> to vector<64x1xf32>
    %4 = vector.extract_strided_slice %0 {offsets = [0, 3], sizes = [64, 1], strides = [1, 1]} : vector<64x4xf32> to vector<64x1xf32>
    %5 = arith.addf %1, %2 : vector<64x1xf32>
    %cst = arith.constant 1.000000e+00 : f32
    %6 = vector.broadcast %cst : f32 to vector<64x1xf32>
    %7 = arith.divf %6, %5 : vector<64x1xf32>
    %8 = arith.addf %3, %4 : vector<64x1xf32>
    %cst_1 = arith.constant 1.000000e+00 : f32
    %9 = vector.broadcast %cst_1 : f32 to vector<64x1xf32>
    %10 = arith.divf %9, %8 : vector<64x1xf32>
    %11 = arith.mulf %1, %7 : vector<64x1xf32>
    %12 = arith.mulf %2, %7 : vector<64x1xf32>
    %13 = arith.mulf %3, %10 : vector<64x1xf32>
    %14 = arith.mulf %4, %10 : vector<64x1xf32>
    %c0_2 = arith.constant 0 : index
    %c0_3 = arith.constant 0 : index
    %15 = vector.load %arg1[%c0_2, %c0_3] : memref<64x32xf32, #tpu.memory_space<vmem>>, vector<64x32xf32>
    %c0_4 = arith.constant 0 : index
    %c0_5 = arith.constant 0 : index
    %c0_6 = arith.constant 0 : index
    %16 = vector.load %arg3[%c0_4, %c0_5, %c0_6] : memref<5x32x32xf32, #tpu.memory_space<vmem>>, vector<1x32x32xf32>
    %17 = vector.shape_cast %16 : vector<1x32x32xf32> to vector<32x32xf32>
    %c1 = arith.constant 1 : index
    %c0_7 = arith.constant 0 : index
    %c0_8 = arith.constant 0 : index
    %18 = vector.load %arg3[%c1, %c0_7, %c0_8] : memref<5x32x32xf32, #tpu.memory_space<vmem>>, vector<1x32x32xf32>
    %19 = vector.shape_cast %18 : vector<1x32x32xf32> to vector<32x32xf32>
    %c2 = arith.constant 2 : index
    %c0_9 = arith.constant 0 : index
    %c0_10 = arith.constant 0 : index
    %20 = vector.load %arg3[%c2, %c0_9, %c0_10] : memref<5x32x32xf32, #tpu.memory_space<vmem>>, vector<1x32x32xf32>
    %21 = vector.shape_cast %20 : vector<1x32x32xf32> to vector<32x32xf32>
    %c3 = arith.constant 3 : index
    %c0_11 = arith.constant 0 : index
    %c0_12 = arith.constant 0 : index
    %22 = vector.load %arg3[%c3, %c0_11, %c0_12] : memref<5x32x32xf32, #tpu.memory_space<vmem>>, vector<1x32x32xf32>
    %23 = vector.shape_cast %22 : vector<1x32x32xf32> to vector<32x32xf32>
    %c4 = arith.constant 4 : index
    %c0_13 = arith.constant 0 : index
    %c0_14 = arith.constant 0 : index
    %24 = vector.load %arg3[%c4, %c0_13, %c0_14] : memref<5x32x32xf32, #tpu.memory_space<vmem>>, vector<1x32x32xf32>
    %25 = vector.shape_cast %24 : vector<1x32x32xf32> to vector<32x32xf32>
    %26 = vector.broadcast %11 : vector<64x1xf32> to vector<64x32xf32>
    %27 = arith.mulf %26, %15 : vector<64x32xf32>
    %cst_15 = arith.constant dense<0.000000e+00> : vector<64x32xf32>
    %28 = tpu.matmul %27, %17, %cst_15 {dimension_numbers = #tpu.dot_dimension_numbers<[1], [0], [0], [1], [0, 0, 1, 1], [], []>} : vector<64x32xf32>, vector<32x32xf32>, vector<64x32xf32> -> vector<64x32xf32>
    %29 = vector.broadcast %12 : vector<64x1xf32> to vector<64x32xf32>
    %30 = arith.mulf %29, %15 : vector<64x32xf32>
    %cst_16 = arith.constant dense<0.000000e+00> : vector<64x32xf32>
    %31 = tpu.matmul %30, %19, %cst_16 {dimension_numbers = #tpu.dot_dimension_numbers<[1], [0], [0], [1], [0, 0, 1, 1], [], []>} : vector<64x32xf32>, vector<32x32xf32>, vector<64x32xf32> -> vector<64x32xf32>
    %32 = arith.addf %28, %31 : vector<64x32xf32>
    %33 = vector.broadcast %13 : vector<64x1xf32> to vector<64x32xf32>
    %34 = arith.mulf %33, %32 : vector<64x32xf32>
    %35 = vector.shape_cast %34 : vector<64x32xf32> to vector<8x8x32xf32>
    %cst_17 = arith.constant dense<0.000000e+00> : vector<8x32xf32>
    %36 = vector.multi_reduction <add>, %35, %cst_17 [1] : vector<8x8x32xf32> to vector<8x32xf32>
    %37 = vector.broadcast %14 : vector<64x1xf32> to vector<64x32xf32>
    %38 = arith.mulf %37, %32 : vector<64x32xf32>
    %39 = vector.shape_cast %38 : vector<64x32xf32> to vector<8x8x32xf32>
    %cst_18 = arith.constant dense<0.000000e+00> : vector<8x32xf32>
    %40 = vector.multi_reduction <add>, %39, %cst_18 [1] : vector<8x8x32xf32> to vector<8x32xf32>
    %cst_19 = arith.constant dense<0.000000e+00> : vector<8x32xf32>
    %41 = tpu.matmul %36, %21, %cst_19 {dimension_numbers = #tpu.dot_dimension_numbers<[1], [0], [0], [1], [0, 0, 1, 1], [], []>} : vector<8x32xf32>, vector<32x32xf32>, vector<8x32xf32> -> vector<8x32xf32>
    %cst_20 = arith.constant dense<0.000000e+00> : vector<8x32xf32>
    %42 = tpu.matmul %40, %23, %cst_20 {dimension_numbers = #tpu.dot_dimension_numbers<[1], [0], [0], [1], [0, 0, 1, 1], [], []>} : vector<8x32xf32>, vector<32x32xf32>, vector<8x32xf32> -> vector<8x32xf32>
    %43 = arith.addf %41, %42 : vector<8x32xf32>
    %c0_21 = arith.constant 0 : index
    %c0_22 = arith.constant 0 : index
    %44 = vector.load %arg5[%c0_21, %c0_22] : memref<8x32xf32, #tpu.memory_space<vmem>>, vector<8x32xf32>
    tpu.vector_store %arg5[%c0_21, %c0_22], %43 {strides = array<i32>} : memref<8x32xf32, #tpu.memory_space<vmem>>, vector<8x32xf32>,
    %c0_23 = arith.constant 0 : index
    %c0_24 = arith.constant 0 : index
    %45 = vector.load %arg2[%c0_23, %c0_24] : memref<1x32xf32, #tpu.memory_space<vmem>>, vector<1x32xf32>
    %c0_i32 = arith.constant 0 : i32
    %46 = arith.index_cast %c0_i32 : i32 to index
    %c0_25 = arith.constant 0 : index
    %47 = vector.load %arg5[%46, %c0_25] : memref<8x32xf32, #tpu.memory_space<vmem>>, vector<1x32xf32>
    %cst_26 = arith.constant dense<0.000000e+00> : vector<1x32xf32>
    %48 = tpu.matmul %45, %25, %cst_26 {dimension_numbers = #tpu.dot_dimension_numbers<[1], [0], [0], [1], [0, 0, 1, 1], [], []>} : vector<1x32xf32>, vector<32x32xf32>, vector<1x32xf32> -> vector<1x32xf32>
    %49 = arith.addf %47, %48 : vector<1x32xf32>
    %50 = arith.negf %49 : vector<1x32xf32>
    %51 = math.exp %50 : vector<1x32xf32>
    %cst_27 = arith.constant 1.000000e+00 : f32
    %52 = vector.broadcast %cst_27 : f32 to vector<1x32xf32>
    %53 = arith.addf %52, %51 : vector<1x32xf32>
    %54 = arith.divf %52, %53 : vector<1x32xf32>
    %55 = arith.index_cast %c0_i32 : i32 to index
    %c0_28 = arith.constant 0 : index
    %56 = vector.load %arg4[%55, %c0_28] : memref<8x32xf32, #tpu.memory_space<vmem>>, vector<1x32xf32>
    tpu.vector_store %arg4[%55, %c0_28], %54 {strides = array<i32>} : memref<8x32xf32, #tpu.memory_space<vmem>>, vector<1x32xf32>,
    %c1_i32 = arith.constant 1 : i32
    %57 = arith.index_cast %c1_i32 : i32 to index
    %c0_29 = arith.constant 0 : index
    %58 = vector.load %arg5[%57, %c0_29] : memref<8x32xf32, #tpu.memory_space<vmem>>, vector<1x32xf32>
    %cst_30 = arith.constant dense<0.000000e+00> : vector<1x32xf32>
    %59 = tpu.matmul %54, %25, %cst_30 {dimension_numbers = #tpu.dot_dimension_numbers<[1], [0], [0], [1], [0, 0, 1, 1], [], []>} : vector<1x32xf32>, vector<32x32xf32>, vector<1x32xf32> -> vector<1x32xf32>
    %60 = arith.addf %58, %59 : vector<1x32xf32>
    %61 = arith.negf %60 : vector<1x32xf32>
    %62 = math.exp %61 : vector<1x32xf32>
    %cst_31 = arith.constant 1.000000e+00 : f32
    %63 = vector.broadcast %cst_31 : f32 to vector<1x32xf32>
    %64 = arith.addf %63, %62 : vector<1x32xf32>
    %65 = arith.divf %63, %64 : vector<1x32xf32>
    %66 = arith.index_cast %c1_i32 : i32 to index
    %c0_32 = arith.constant 0 : index
    %67 = vector.load %arg4[%66, %c0_32] : memref<8x32xf32, #tpu.memory_space<vmem>>, vector<1x32xf32>
    tpu.vector_store %arg4[%66, %c0_32], %65 {strides = array<i32>} : memref<8x32xf32, #tpu.memory_space<vmem>>, vector<1x32xf32>,
    %c2_i32 = arith.constant 2 : i32
    %68 = arith.index_cast %c2_i32 : i32 to index
    %c0_33 = arith.constant 0 : index
    %69 = vector.load %arg5[%68, %c0_33] : memref<8x32xf32, #tpu.memory_space<vmem>>, vector<1x32xf32>
    %cst_34 = arith.constant dense<0.000000e+00> : vector<1x32xf32>
    %70 = tpu.matmul %65, %25, %cst_34 {dimension_numbers = #tpu.dot_dimension_numbers<[1], [0], [0], [1], [0, 0, 1, 1], [], []>} : vector<1x32xf32>, vector<32x32xf32>, vector<1x32xf32> -> vector<1x32xf32>
    %71 = arith.addf %69, %70 : vector<1x32xf32>
    %72 = arith.negf %71 : vector<1x32xf32>
    %73 = math.exp %72 : vector<1x32xf32>
    %cst_35 = arith.constant 1.000000e+00 : f32
    %74 = vector.broadcast %cst_35 : f32 to vector<1x32xf32>
    %75 = arith.addf %74, %73 : vector<1x32xf32>
    %76 = arith.divf %74, %75 : vector<1x32xf32>
    %77 = arith.index_cast %c2_i32 : i32 to index
    %c0_36 = arith.constant 0 : index
    %78 = vector.load %arg4[%77, %c0_36] : memref<8x32xf32, #tpu.memory_space<vmem>>, vector<1x32xf32>
    tpu.vector_store %arg4[%77, %c0_36], %76 {strides = array<i32>} : memref<8x32xf32, #tpu.memory_space<vmem>>, vector<1x32xf32>,
    %c3_i32 = arith.constant 3 : i32
    %79 = arith.index_cast %c3_i32 : i32 to index
    %c0_37 = arith.constant 0 : index
    %80 = vector.load %arg5[%79, %c0_37] : memref<8x32xf32, #tpu.memory_space<vmem>>, vector<1x32xf32>
    %cst_38 = arith.constant dense<0.000000e+00> : vector<1x32xf32>
    %81 = tpu.matmul %76, %25, %cst_38 {dimension_numbers = #tpu.dot_dimension_numbers<[1], [0], [0], [1], [0, 0, 1, 1], [], []>} : vector<1x32xf32>, vector<32x32xf32>, vector<1x32xf32> -> vector<1x32xf32>
    %82 = arith.addf %80, %81 : vector<1x32xf32>
    %83 = arith.negf %82 : vector<1x32xf32>
    %84 = math.exp %83 : vector<1x32xf32>
    %cst_39 = arith.constant 1.000000e+00 : f32
    %85 = vector.broadcast %cst_39 : f32 to vector<1x32xf32>
    %86 = arith.addf %85, %84 : vector<1x32xf32>
    %87 = arith.divf %85, %86 : vector<1x32xf32>
    %88 = arith.index_cast %c3_i32 : i32 to index
    %c0_40 = arith.constant 0 : index
    %89 = vector.load %arg4[%88, %c0_40] : memref<8x32xf32, #tpu.memory_space<vmem>>, vector<1x32xf32>
    tpu.vector_store %arg4[%88, %c0_40], %87 {strides = array<i32>} : memref<8x32xf32, #tpu.memory_space<vmem>>, vector<1x32xf32>,
    %c4_i32 = arith.constant 4 : i32
    %90 = arith.index_cast %c4_i32 : i32 to index
    %c0_41 = arith.constant 0 : index
    %91 = vector.load %arg5[%90, %c0_41] : memref<8x32xf32, #tpu.memory_space<vmem>>, vector<1x32xf32>
    %cst_42 = arith.constant dense<0.000000e+00> : vector<1x32xf32>
    %92 = tpu.matmul %87, %25, %cst_42 {dimension_numbers = #tpu.dot_dimension_numbers<[1], [0], [0], [1], [0, 0, 1, 1], [], []>} : vector<1x32xf32>, vector<32x32xf32>, vector<1x32xf32> -> vector<1x32xf32>
    %93 = arith.addf %91, %92 : vector<1x32xf32>
    %94 = arith.negf %93 : vector<1x32xf32>
    %95 = math.exp %94 : vector<1x32xf32>
    %cst_43 = arith.constant 1.000000e+00 : f32
    %96 = vector.broadcast %cst_43 : f32 to vector<1x32xf32>
    %97 = arith.addf %96, %95 : vector<1x32xf32>
    %98 = arith.divf %96, %97 : vector<1x32xf32>
    %99 = arith.index_cast %c4_i32 : i32 to index
    %c0_44 = arith.constant 0 : index
    %100 = vector.load %arg4[%99, %c0_44] : memref<8x32xf32, #tpu.memory_space<vmem>>, vector<1x32xf32>
    tpu.vector_store %arg4[%99, %c0_44], %98 {strides = array<i32>} : memref<8x32xf32, #tpu.memory_space<vmem>>, vector<1x32xf32>,
    %c5_i32 = arith.constant 5 : i32
    %101 = arith.index_cast %c5_i32 : i32 to index
    %c0_45 = arith.constant 0 : index
    %102 = vector.load %arg5[%101, %c0_45] : memref<8x32xf32, #tpu.memory_space<vmem>>, vector<1x32xf32>
    %cst_46 = arith.constant dense<0.000000e+00> : vector<1x32xf32>
    %103 = tpu.matmul %98, %25, %cst_46 {dimension_numbers = #tpu.dot_dimension_numbers<[1], [0], [0], [1], [0, 0, 1, 1], [], []>} : vector<1x32xf32>, vector<32x32xf32>, vector<1x32xf32> -> vector<1x32xf32>
    %104 = arith.addf %102, %103 : vector<1x32xf32>
    %105 = arith.negf %104 : vector<1x32xf32>
    %106 = math.exp %105 : vector<1x32xf32>
    %cst_47 = arith.constant 1.000000e+00 : f32
    %107 = vector.broadcast %cst_47 : f32 to vector<1x32xf32>
    %108 = arith.addf %107, %106 : vector<1x32xf32>
    %109 = arith.divf %107, %108 : vector<1x32xf32>
    %110 = arith.index_cast %c5_i32 : i32 to index
    %c0_48 = arith.constant 0 : index
    %111 = vector.load %arg4[%110, %c0_48] : memref<8x32xf32, #tpu.memory_space<vmem>>, vector<1x32xf32>
    tpu.vector_store %arg4[%110, %c0_48], %109 {strides = array<i32>} : memref<8x32xf32, #tpu.memory_space<vmem>>, vector<1x32xf32>,
    %c6_i32 = arith.constant 6 : i32
    %112 = arith.index_cast %c6_i32 : i32 to index
    %c0_49 = arith.constant 0 : index
    %113 = vector.load %arg5[%112, %c0_49] : memref<8x32xf32, #tpu.memory_space<vmem>>, vector<1x32xf32>
    %cst_50 = arith.constant dense<0.000000e+00> : vector<1x32xf32>
    %114 = tpu.matmul %109, %25, %cst_50 {dimension_numbers = #tpu.dot_dimension_numbers<[1], [0], [0], [1], [0, 0, 1, 1], [], []>} : vector<1x32xf32>, vector<32x32xf32>, vector<1x32xf32> -> vector<1x32xf32>
    %115 = arith.addf %113, %114 : vector<1x32xf32>
    %116 = arith.negf %115 : vector<1x32xf32>
    %117 = math.exp %116 : vector<1x32xf32>
    %cst_51 = arith.constant 1.000000e+00 : f32
    %118 = vector.broadcast %cst_51 : f32 to vector<1x32xf32>
    %119 = arith.addf %118, %117 : vector<1x32xf32>
    %120 = arith.divf %118, %119 : vector<1x32xf32>
    %121 = arith.index_cast %c6_i32 : i32 to index
    %c0_52 = arith.constant 0 : index
    %122 = vector.load %arg4[%121, %c0_52] : memref<8x32xf32, #tpu.memory_space<vmem>>, vector<1x32xf32>
    tpu.vector_store %arg4[%121, %c0_52], %120 {strides = array<i32>} : memref<8x32xf32, #tpu.memory_space<vmem>>, vector<1x32xf32>,
    %c7_i32 = arith.constant 7 : i32
    %123 = arith.index_cast %c7_i32 : i32 to index
    %c0_53 = arith.constant 0 : index
    %124 = vector.load %arg5[%123, %c0_53] : memref<8x32xf32, #tpu.memory_space<vmem>>, vector<1x32xf32>
    %cst_54 = arith.constant dense<0.000000e+00> : vector<1x32xf32>
    %125 = tpu.matmul %120, %25, %cst_54 {dimension_numbers = #tpu.dot_dimension_numbers<[1], [0], [0], [1], [0, 0, 1, 1], [], []>} : vector<1x32xf32>, vector<32x32xf32>, vector<1x32xf32> -> vector<1x32xf32>
    %126 = arith.addf %124, %125 : vector<1x32xf32>
    %127 = arith.negf %126 : vector<1x32xf32>
    %128 = math.exp %127 : vector<1x32xf32>
    %cst_55 = arith.constant 1.000000e+00 : f32
    %129 = vector.broadcast %cst_55 : f32 to vector<1x32xf32>
    %130 = arith.addf %129, %128 : vector<1x32xf32>
    %131 = arith.divf %129, %130 : vector<1x32xf32>
    %132 = arith.index_cast %c7_i32 : i32 to index
    %c0_56 = arith.constant 0 : index
    %133 = vector.load %arg4[%132, %c0_56] : memref<8x32xf32, #tpu.memory_space<vmem>>, vector<1x32xf32>
    tpu.vector_store %arg4[%132, %c0_56], %131 {strides = array<i32>} : memref<8x32xf32, #tpu.memory_space<vmem>>, vector<1x32xf32>,
    %c8_i32 = arith.constant 8 : i32
    return
  }
}

</mosaic_0001>

<llo_original>
// kernel: strnn_forward_sequence.1
$region0: #{strnn_forward_sequence.1}
  #allocation0 [shape = 'u32[]', space=smem, size = 0x4, offset = 0x4, fixed_abs, tag = 'smem constant byte address 0x4 - core index']
  #allocation1 [shape = 'u32[144,128]{1,0:T(1,128)}', space=vmem, size = 0x12000, scoped, tag = 'internal scratch']
  #allocation2 [shape = 'f32[8,32]{1,0:T(8,128)}', space=vmem, size = 0x1000, scoped, tag = 'scratch operand']
  %s0 = inlined_call_operand.vmem [shape: f32[64,4], index: 0, kind: input, shape index: {}]
  %s1 = inlined_call_operand.vmem [shape: f32[64,32], index: 1, kind: input, shape index: {}]
  %s2 = inlined_call_operand.vmem [shape: f32[1,32], index: 2, kind: input, shape index: {}]
  %s3 = inlined_call_operand.vmem [shape: f32[5,32,32], index: 3, kind: input, shape index: {}]
  %s4 = inlined_call_operand.hbm [shape: f32[8,32], index: 4, kind: output, shape index: {}]
  %s5 = sld [smem:[#allocation0]]
  $region26: #{strnn_forward_sequence.1} parent=0
    _
  %s7 = ssub.s32 1, %s5
  %s8 = scalar_select 0, %s7, %s5
  $region1: #{strnn_forward_sequence.1} parent=0
    #allocation3 [shape = 'u8[4096]{0}', space=vmem, size = 0x1000, scoped, tag = 'output window, operand 0, single buffered']
    #allocation4 [shape = 's32[1]{0}', space=sflag, size = 0x4, scoped, tag = 'scoped memory for strnn_forward_sequence.1']
    %9 = vsyncpa [#allocation4], 0
    // Predicated region
    $region2: #{strnn_forward_sequence.1} parent=1 // pred_check
      _
    $region3: #{strnn_forward_sequence.1} parent=1 // pred_check_branch
      %11 = sbr.rel (0) target = $region5
    $region4: #{strnn_forward_sequence.1} parent=1 // pred_region
      _
    $region5: #{strnn_forward_sequence.1} parent=1 // pred_fallthru
      _
    // Predicated region
    $region6: #{strnn_forward_sequence.1} parent=1 // pred_check
      _
    $region7: #{strnn_forward_sequence.1} parent=1 // pred_check_branch
      %13 = sbr.rel (0) target = $region9
    $region8: #{strnn_forward_sequence.1} parent=1 // pred_region
      _
    $region9: #{strnn_forward_sequence.1} parent=1 // pred_fallthru
      _
    // Predicated region
    $region10: #{strnn_forward_sequence.1} parent=1 // pred_check
      _
    $region11: #{strnn_forward_sequence.1} parent=1 // pred_check_branch
      %15 = sbr.rel (0) target = $region13
    $region12: #{strnn_forward_sequence.1} parent=1 // pred_region
      _
    $region13: #{strnn_forward_sequence.1} parent=1 // pred_fallthru
      _
    // Predicated region
    $region14: #{strnn_forward_sequence.1} parent=1 // pred_check
      _
    $region15: #{strnn_forward_sequence.1} parent=1 // pred_check_branch
      %17 = sbr.rel (0) target = $region17
    $region16: #{strnn_forward_sequence.1} parent=1 // pred_region
      _
    $region17: #{strnn_forward_sequence.1} parent=1 // pred_fallthru
      _
    %v18 = vld [vmem:[%s0] sm:$0xff]
    %v19 = vld [vmem:[%s0 + $0x8] sm:$0xff]
    %v20 = vld [vmem:[%s0 + $0x10] sm:$0xff]
    %v21 = vld [vmem:[%s0 + $0x18] sm:$0xff]
    %v22 = vld [vmem:[%s0 + $0x20] sm:$0xff]
    %v23 = vld [vmem:[%s0 + $0x28] sm:$0xff]
    %v24 = vld [vmem:[%s0 + $0x30] sm:$0xff]
    %v25 = vld [vmem:[%s0 + $0x38] sm:$0xff]
    %34 = vrot.lane.b32.xlu0 %v18, 127
    %v35 = vpop.permute.xlu0 %34
    %36 = vrot.lane.b32.xlu0 %v19, 127
    %v37 = vpop.permute.xlu0 %36
    %38 = vrot.lane.b32.xlu0 %v20, 127
    %v39 = vpop.permute.xlu0 %38
    %40 = vrot.lane.b32.xlu0 %v21, 127
    %v41 = vpop.permute.xlu0 %40
    %42 = vrot.lane.b32.xlu0 %v22, 127
    %v43 = vpop.permute.xlu0 %42
    %44 = vrot.lane.b32.xlu0 %v23, 127
    %v45 = vpop.permute.xlu0 %44
    %46 = vrot.lane.b32.xlu0 %v24, 127
    %v47 = vpop.permute.xlu0 %46
    %48 = vrot.lane.b32.xlu0 %v25, 127
    %v49 = vpop.permute.xlu0 %48
    %v58 = vadd.f32 %v18, %v35
    %v59 = vadd.f32 %v19, %v37
    %v60 = vadd.f32 %v20, %v39
    %v61 = vadd.f32 %v21, %v41
    %v62 = vadd.f32 %v22, %v43
    %v63 = vadd.f32 %v23, %v45
    %v64 = vadd.f32 %v24, %v47
    %v65 = vadd.f32 %v25, %v49
    %v66 = vrcp.pop %v58
    %v67 = vmul.f32 1.0, %v66
    %v68 = vrcp.pop %v59
    %v69 = vmul.f32 1.0, %v68
    %v70 = vrcp.pop %v60
    %v71 = vmul.f32 1.0, %v70
    %v72 = vrcp.pop %v61
    %v73 = vmul.f32 1.0, %v72
    %v74 = vrcp.pop %v62
    %v75 = vmul.f32 1.0, %v74
    %v76 = vrcp.pop %v63
    %v77 = vmul.f32 1.0, %v76
    %v78 = vrcp.pop %v64
    %v79 = vmul.f32 1.0, %v78
    %v80 = vrcp.pop %v65
    %v81 = vmul.f32 1.0, %v80
    %v82 = vmul.f32 %v18, %v67
    %v83 = vmul.f32 %v19, %v69
    %v84 = vmul.f32 %v20, %v71
    %v85 = vmul.f32 %v21, %v73
    %v86 = vmul.f32 %v22, %v75
    %v87 = vmul.f32 %v23, %v77
    %v88 = vmul.f32 %v24, %v79
    %v89 = vmul.f32 %v25, %v81
    %98 = vrot.lane.b32.xlu0 %v67, 1
    %v99 = vpop.permute.xlu0 %98
    %100 = vrot.lane.b32.xlu0 %v69, 1
    %v101 = vpop.permute.xlu0 %100
    %102 = vrot.lane.b32.xlu0 %v71, 1
    %v103 = vpop.permute.xlu0 %102
    %104 = vrot.lane.b32.xlu0 %v73, 1
    %v105 = vpop.permute.xlu0 %104
    %106 = vrot.lane.b32.xlu0 %v75, 1
    %v107 = vpop.permute.xlu0 %106
    %108 = vrot.lane.b32.xlu0 %v77, 1
    %v109 = vpop.permute.xlu0 %108
    %110 = vrot.lane.b32.xlu0 %v79, 1
    %v111 = vpop.permute.xlu0 %110
    %112 = vrot.lane.b32.xlu0 %v81, 1
    %v113 = vpop.permute.xlu0 %112
    %v122 = vmul.f32 %v18, %v99
    %v123 = vmul.f32 %v19, %v101
    %v124 = vmul.f32 %v20, %v103
    %v125 = vmul.f32 %v21, %v105
    %v126 = vmul.f32 %v22, %v107
    %v127 = vmul.f32 %v23, %v109
    %v128 = vmul.f32 %v24, %v111
    %v129 = vmul.f32 %v25, %v113
    %v130 = vld [vmem:[%s1] sm:$0xff]
    %v131 = vld [vmem:[%s1 + $0x8] sm:$0xff]
    %v132 = vld [vmem:[%s1 + $0x10] sm:$0xff]
    %v133 = vld [vmem:[%s1 + $0x18] sm:$0xff]
    %v134 = vld [vmem:[%s1 + $0x20] sm:$0xff]
    %v135 = vld [vmem:[%s1 + $0x28] sm:$0xff]
    %v136 = vld [vmem:[%s1 + $0x30] sm:$0xff]
    %v137 = vld [vmem:[%s1 + $0x38] sm:$0xff]
    %v138 = vld [vmem:[%s3] sm:$0xff]
    %v139 = vld [vmem:[%s3 + $0x8] sm:$0xff]
    %v140 = vld [vmem:[%s3 + $0x10] sm:$0xff]
    %v141 = vld [vmem:[%s3 + $0x18] sm:$0xff]
    %s142 = scalar_lea.vmem %s3, 32
    %v143 = vld [vmem:[%s142] sm:$0xff]
    %v144 = vld [vmem:[%s142 + $0x8] sm:$0xff]
    %v145 = vld [vmem:[%s142 + $0x10] sm:$0xff]
    %v146 = vld [vmem:[%s142 + $0x18] sm:$0xff]
    %s147 = scalar_lea.vmem %s3, 64
    %v148 = vld [vmem:[%s147] sm:$0xff]
    %v149 = vld [vmem:[%s147 + $0x8] sm:$0xff]
    %v150 = vld [vmem:[%s147 + $0x10] sm:$0xff]
    %v151 = vld [vmem:[%s147 + $0x18] sm:$0xff]
    %s152 = scalar_lea.vmem %s3, 96
    %v153 = vld [vmem:[%s152] sm:$0xff]
    %v154 = vld [vmem:[%s152 + $0x8] sm:$0xff]
    %v155 = vld [vmem:[%s152 + $0x10] sm:$0xff]
    %v156 = vld [vmem:[%s152 + $0x18] sm:$0xff]
    %s157 = scalar_lea.vmem %s3, 128
    %v158 = vld [vmem:[%s157] sm:$0xff]
    %v159 = vld [vmem:[%s157 + $0x8] sm:$0xff]
    %v160 = vld [vmem:[%s157 + $0x10] sm:$0xff]
    %v161 = vld [vmem:[%s157 + $0x18] sm:$0xff]
    %163 = vset.pattern.permute.xlu0 0
    %164 = vperm.xlu0 %163, %v82
    %v165 = vpop.permute.xlu0 %164
    %168 = vset.pattern.permute.xlu0 0
    %169 = vperm.xlu0 %168, %v83
    %v170 = vpop.permute.xlu0 %169
    %173 = vset.pattern.permute.xlu0 0
    %174 = vperm.xlu0 %173, %v84
    %v175 = vpop.permute.xlu0 %174
    %178 = vset.pattern.permute.xlu0 0
    %179 = vperm.xlu0 %178, %v85
    %v180 = vpop.permute.xlu0 %179
    %183 = vset.pattern.permute.xlu0 0
    %184 = vperm.xlu0 %183, %v86
    %v185 = vpop.permute.xlu0 %184
    %188 = vset.pattern.permute.xlu0 0
    %189 = vperm.xlu0 %188, %v87
    %v190 = vpop.permute.xlu0 %189
    %193 = vset.pattern.permute.xlu0 0
    %194 = vperm.xlu0 %193, %v88
    %v195 = vpop.permute.xlu0 %194
    %198 = vset.pattern.permute.xlu0 0
    %199 = vperm.xlu0 %198, %v89
    %v200 = vpop.permute.xlu0 %199
    %v202 = vmul.f32 %v165, %v130
    %v203 = vmul.f32 %v170, %v131
    %v204 = vmul.f32 %v175, %v132
    %v205 = vmul.f32 %v180, %v133
    %v206 = vmul.f32 %v185, %v134
    %v207 = vmul.f32 %v190, %v135
    %v208 = vmul.f32 %v195, %v136
    %v209 = vmul.f32 %v200, %v137
    %211 = vset.pattern.permute.xlu0 1
    %212 = vperm.xlu0 %211, %v122
    %v213 = vpop.permute.xlu0 %212
    %216 = vset.pattern.permute.xlu0 1
    %217 = vperm.xlu0 %216, %v123
    %v218 = vpop.permute.xlu0 %217
    %221 = vset.pattern.permute.xlu0 1
    %222 = vperm.xlu0 %221, %v124
    %v223 = vpop.permute.xlu0 %222
    %226 = vset.pattern.permute.xlu0 1
    %227 = vperm.xlu0 %226, %v125
    %v228 = vpop.permute.xlu0 %227
    %231 = vset.pattern.permute.xlu0 1
    %232 = vperm.xlu0 %231, %v126
    %v233 = vpop.permute.xlu0 %232
    %236 = vset.pattern.permute.xlu0 1
    %237 = vperm.xlu0 %236, %v127
    %v238 = vpop.permute.xlu0 %237
    %241 = vset.pattern.permute.xlu0 1
    %242 = vperm.xlu0 %241, %v128
    %v243 = vpop.permute.xlu0 %242
    %246 = vset.pattern.permute.xlu0 1
    %247 = vperm.xlu0 %246, %v129
    %v248 = vpop.permute.xlu0 %247
    %v250 = vmul.f32 %v213, %v130
    %v251 = vmul.f32 %v218, %v131
    %v252 = vmul.f32 %v223, %v132
    %v253 = vmul.f32 %v228, %v133
    %v254 = vmul.f32 %v233, %v134
    %v255 = vmul.f32 %v238, %v135
    %v256 = vmul.f32 %v243, %v136
    %v257 = vmul.f32 %v248, %v137
    %vm258 = vcmask 261120
    %v260 = vsel %vm258, %v250, 0
    %v263 = vsel %vm258, %v251, 0
    %v266 = vsel %vm258, %v252, 0
    %v269 = vsel %vm258, %v253, 0
    %v272 = vsel %vm258, %v254, 0
    %v275 = vsel %vm258, %v255, 0
    %v278 = vsel %vm258, %v256, 0
    %v281 = vsel %vm258, %v257, 0
    %283 = vmatprep.subr.mxu0 0.0
    %284 = vmatpush1.msra.mxu0 0.0
    %285 = vmatprep.subr.mxu0 0.0
    %286 = vmatpush1.msra.mxu0 0.0
    %287 = vmatprep.subr.mxu0 0.0
    %288 = vmatpush1.msra.mxu0 0.0
    %289 = vmatprep.subr.mxu0 0.0
    %290 = vmatpush1.msra.mxu0 0.0
    %291 = vmatprep.subr.mxu0 0.0
    %292 = vmatpush1.msra.mxu0 0.0
    %293 = vmatprep.subr.mxu0 0.0
    %294 = vmatpush1.msra.mxu0 0.0
    %295 = vmatprep.subr.mxu0 0.0
    %296 = vmatpush1.msra.mxu0 0.0
    %297 = vmatprep.subr.mxu0 0.0
    %298 = vmatpush1.msra.mxu0 0.0
    %299 = vmatprep.subr.mxu0 0.0
    %300 = vmatpush1.msra.mxu0 0.0
    %301 = vmatprep.subr.mxu0 0.0
    %302 = vmatpush1.msra.mxu0 0.0
    %303 = vmatprep.subr.mxu0 0.0
    %304 = vmatpush1.msra.mxu0 0.0
    %305 = vmatprep.subr.mxu0 0.0
    %306 = vmatpush1.msra.mxu0 0.0
    %307 = vmatprep.subr.mxu0 0.0
    %308 = vmatpush1.msra.mxu0 %v146
    %309 = vmatprep.subr.mxu0 0.0
    %310 = vmatpush1.msra.mxu0 %v145
    %311 = vmatprep.subr.mxu0 0.0
    %312 = vmatpush1.msra.mxu0 %v144
    %313 = vmatprep.subr.mxu0 0.0
    %314 = vmatpush1.msra.mxu0 %v143
    %315 = vmatprep.subr.mxu0 0.0
    %316 = vmatpush2.msra.mxu0 0.0
    %317 = vmatprep.subr.mxu0 0.0
    %318 = vmatpush2.msra.mxu0 0.0
    %319 = vmatprep.subr.mxu0 0.0
    %320 = vmatpush2.msra.mxu0 0.0
    %321 = vmatprep.subr.mxu0 0.0
    %322 = vmatpush2.msra.mxu0 0.0
    %323 = vmatprep.subr.mxu0 0.0
    %324 = vmatpush2.msra.mxu0 0.0
    %325 = vmatprep.subr.mxu0 0.0
    %326 = vmatpush2.msra.mxu0 0.0
    %327 = vmatprep.subr.mxu0 0.0
    %328 = vmatpush2.msra.mxu0 0.0
    %329 = vmatprep.subr.mxu0 0.0
    %330 = vmatpush2.msra.mxu0 0.0
    %331 = vmatprep.subr.mxu0 0.0
    %332 = vmatpush2.msra.mxu0 0.0
    %333 = vmatprep.subr.mxu0 0.0
    %334 = vmatpush2.msra.mxu0 0.0
    %335 = vmatprep.subr.mxu0 0.0
    %336 = vmatpush2.msra.mxu0 0.0
    %337 = vmatprep.subr.mxu0 0.0
    %338 = vmatpush2.msra.mxu0 0.0
    %339 = vmatprep.subr.mxu0 0.0
    %340 = vmatpush2.msra.mxu0 0.0
    %341 = vmatprep.subr.mxu0 0.0
    %342 = vmatpush2.msra.mxu0 0.0
    %343 = vmatprep.subr.mxu0 0.0
    %344 = vmatpush2.msra.mxu0 0.0
    %345 = vmatprep.subr.mxu0 0.0
    %346 = vmatpush2.msra.mxu0 0.0
    %347 = vmatprep.mubr.f32.mxu0 0.0
    %348 = vmatmul.mubr.f32.gmra.mxu0 %v260
    %v349 = vpop.f32.mrf.mxu0
    %v350 = vadd.f32 0.0, %v349
    %v351 = vpop.f32.mrf.mxu0
    %352 = vmatprep.mubr.f32.mxu0 0.0
    %353 = vmatmul.mubr.f32.gmra.mxu0 %v263
    %v354 = vpop.f32.mrf.mxu0
    %v355 = vadd.f32 0.0, %v354
    %v356 = vpop.f32.mrf.mxu0
    %357 = vmatprep.mubr.f32.mxu0 0.0
    %358 = vmatmul.mubr.f32.gmra.mxu0 %v266
    %v359 = vpop.f32.mrf.mxu0
    %v360 = vadd.f32 0.0, %v359
    %v361 = vpop.f32.mrf.mxu0
    %362 = vmatprep.mubr.f32.mxu0 0.0
    %363 = vmatmul.mubr.f32.gmra.mxu0 %v269
    %v364 = vpop.f32.mrf.mxu0
    %v365 = vadd.f32 0.0, %v364
    %v366 = vpop.f32.mrf.mxu0
    %367 = vmatprep.mubr.f32.mxu0 0.0
    %368 = vmatmul.mubr.f32.gmra.mxu0 %v272
    %v369 = vpop.f32.mrf.mxu0
    %v370 = vadd.f32 0.0, %v369
    %v371 = vpop.f32.mrf.mxu0
    %372 = vmatprep.mubr.f32.mxu0 0.0
    %373 = vmatmul.mubr.f32.gmra.mxu0 %v275
    %v374 = vpop.f32.mrf.mxu0
    %v375 = vadd.f32 0.0, %v374
    %v376 = vpop.f32.mrf.mxu0
    %377 = vmatprep.mubr.f32.mxu0 0.0
    %378 = vmatmul.mubr.f32.gmra.mxu0 %v278
    %v379 = vpop.f32.mrf.mxu0
    %v380 = vadd.f32 0.0, %v379
    %v381 = vpop.f32.mrf.mxu0
    %382 = vmatprep.mubr.f32.mxu0 0.0
    %383 = vmatmul.mubr.f32.gmra.mxu0 %v281
    %v384 = vpop.f32.mrf.mxu0
    %v385 = vadd.f32 0.0, %v384
    %v386 = vpop.f32.mrf.mxu0
    %387 = vdwg.mxu0
    %v389 = vsel %vm258, %v202, 0
    %v392 = vsel %vm258, %v203, 0
    %v395 = vsel %vm258, %v204, 0
    %v398 = vsel %vm258, %v205, 0
    %v401 = vsel %vm258, %v206, 0
    %v404 = vsel %vm258, %v207, 0
    %v407 = vsel %vm258, %v208, 0
    %v410 = vsel %vm258, %v209, 0
    %412 = vmatprep.subr.mxu0 0.0
    %413 = vmatpush1.msra.mxu0 0.0
    %414 = vmatprep.subr.mxu0 0.0
    %415 = vmatpush1.msra.mxu0 0.0
    %416 = vmatprep.subr.mxu0 0.0
    %417 = vmatpush1.msra.mxu0 0.0
    %418 = vmatprep.subr.mxu0 0.0
    %419 = vmatpush1.msra.mxu0 0.0
    %420 = vmatprep.subr.mxu0 0.0
    %421 = vmatpush1.msra.mxu0 0.0
    %422 = vmatprep.subr.mxu0 0.0
    %423 = vmatpush1.msra.mxu0 0.0
    %424 = vmatprep.subr.mxu0 0.0
    %425 = vmatpush1.msra.mxu0 0.0
    %426 = vmatprep.subr.mxu0 0.0
    %427 = vmatpush1.msra.mxu0 0.0
    %428 = vmatprep.subr.mxu0 0.0
    %429 = vmatpush1.msra.mxu0 0.0
    %430 = vmatprep.subr.mxu0 0.0
    %431 = vmatpush1.msra.mxu0 0.0
    %432 = vmatprep.subr.mxu0 0.0
    %433 = vmatpush1.msra.mxu0 0.0
    %434 = vmatprep.subr.mxu0 0.0
    %435 = vmatpush1.msra.mxu0 0.0
    %436 = vmatprep.subr.mxu0 0.0
    %437 = vmatpush1.msra.mxu0 %v141
    %438 = vmatprep.subr.mxu0 0.0
    %439 = vmatpush1.msra.mxu0 %v140
    %440 = vmatprep.subr.mxu0 0.0
    %441 = vmatpush1.msra.mxu0 %v139
    %442 = vmatprep.subr.mxu0 0.0
    %443 = vmatpush1.msra.mxu0 %v138
    %444 = vmatprep.subr.mxu0 0.0
    %445 = vmatpush2.msra.mxu0 0.0
    %446 = vmatprep.subr.mxu0 0.0
    %447 = vmatpush2.msra.mxu0 0.0
    %448 = vmatprep.subr.mxu0 0.0
    %449 = vmatpush2.msra.mxu0 0.0
    %450 = vmatprep.subr.mxu0 0.0
    %451 = vmatpush2.msra.mxu0 0.0
    %452 = vmatprep.subr.mxu0 0.0
    %453 = vmatpush2.msra.mxu0 0.0
    %454 = vmatprep.subr.mxu0 0.0
    %455 = vmatpush2.msra.mxu0 0.0
    %456 = vmatprep.subr.mxu0 0.0
    %457 = vmatpush2.msra.mxu0 0.0
    %458 = vmatprep.subr.mxu0 0.0
    %459 = vmatpush2.msra.mxu0 0.0
    %460 = vmatprep.subr.mxu0 0.0
    %461 = vmatpush2.msra.mxu0 0.0
    %462 = vmatprep.subr.mxu0 0.0
    %463 = vmatpush2.msra.mxu0 0.0
    %464 = vmatprep.subr.mxu0 0.0
    %465 = vmatpush2.msra.mxu0 0.0
    %466 = vmatprep.subr.mxu0 0.0
    %467 = vmatpush2.msra.mxu0 0.0
    %468 = vmatprep.subr.mxu0 0.0
    %469 = vmatpush2.msra.mxu0 0.0
    %470 = vmatprep.subr.mxu0 0.0
    %471 = vmatpush2.msra.mxu0 0.0
    %472 = vmatprep.subr.mxu0 0.0
    %473 = vmatpush2.msra.mxu0 0.0
    %474 = vmatprep.subr.mxu0 0.0
    %475 = vmatpush2.msra.mxu0 0.0
    %476 = vmatprep.mubr.f32.mxu0 0.0
    %477 = vmatmul.mubr.f32.gmra.mxu0 %v389
    %v478 = vpop.f32.mrf.mxu0
    %v479 = vadd.f32 %v350, %v478
    %v480 = vpop.f32.mrf.mxu0
    %481 = vmatprep.mubr.f32.mxu0 0.0
    %482 = vmatmul.mubr.f32.gmra.mxu0 %v392
    %v483 = vpop.f32.mrf.mxu0
    %v484 = vadd.f32 %v355, %v483
    %v485 = vpop.f32.mrf.mxu0
    %486 = vmatprep.mubr.f32.mxu0 0.0
    %487 = vmatmul.mubr.f32.gmra.mxu0 %v395
    %v488 = vpop.f32.mrf.mxu0
    %v489 = vadd.f32 %v360, %v488
    %v490 = vpop.f32.mrf.mxu0
    %491 = vmatprep.mubr.f32.mxu0 0.0
    %492 = vmatmul.mubr.f32.gmra.mxu0 %v398
    %v493 = vpop.f32.mrf.mxu0
    %v494 = vadd.f32 %v365, %v493
    %v495 = vpop.f32.mrf.mxu0
    %496 = vmatprep.mubr.f32.mxu0 0.0
    %497 = vmatmul.mubr.f32.gmra.mxu0 %v401
    %v498 = vpop.f32.mrf.mxu0
    %v499 = vadd.f32 %v370, %v498
    %v500 = vpop.f32.mrf.mxu0
    %501 = vmatprep.mubr.f32.mxu0 0.0
    %502 = vmatmul.mubr.f32.gmra.mxu0 %v404
    %v503 = vpop.f32.mrf.mxu0
    %v504 = vadd.f32 %v375, %v503
    %v505 = vpop.f32.mrf.mxu0
    %506 = vmatprep.mubr.f32.mxu0 0.0
    %507 = vmatmul.mubr.f32.gmra.mxu0 %v407
    %v508 = vpop.f32.mrf.mxu0
    %v509 = vadd.f32 %v380, %v508
    %v510 = vpop.f32.mrf.mxu0
    %511 = vmatprep.mubr.f32.mxu0 0.0
    %512 = vmatmul.mubr.f32.gmra.mxu0 %v410
    %v513 = vpop.f32.mrf.mxu0
    %v514 = vadd.f32 %v385, %v513
    %v515 = vpop.f32.mrf.mxu0
    %516 = vdwg.mxu0
    %517 = vset.pattern.permute.xlu0 2
    %518 = vperm.xlu0 %517, %v82
    %v519 = vpop.permute.xlu0 %518
    %521 = vset.pattern.permute.xlu0 2
    %522 = vperm.xlu0 %521, %v83
    %v523 = vpop.permute.xlu0 %522
    %525 = vset.pattern.permute.xlu0 2
    %526 = vperm.xlu0 %525, %v84
    %v527 = vpop.permute.xlu0 %526
    %529 = vset.pattern.permute.xlu0 2
    %530 = vperm.xlu0 %529, %v85
    %v531 = vpop.permute.xlu0 %530
    %533 = vset.pattern.permute.xlu0 2
    %534 = vperm.xlu0 %533, %v86
    %v535 = vpop.permute.xlu0 %534
    %537 = vset.pattern.permute.xlu0 2
    %538 = vperm.xlu0 %537, %v87
    %v539 = vpop.permute.xlu0 %538
    %541 = vset.pattern.permute.xlu0 2
    %542 = vperm.xlu0 %541, %v88
    %v543 = vpop.permute.xlu0 %542
    %545 = vset.pattern.permute.xlu0 2
    %546 = vperm.xlu0 %545, %v89
    %v547 = vpop.permute.xlu0 %546
    %v549 = vmul.f32 %v519, %v479
    %v550 = vmul.f32 %v523, %v484
    %v551 = vmul.f32 %v527, %v489
    %v552 = vmul.f32 %v531, %v494
    %v553 = vmul.f32 %v535, %v499
    %v554 = vmul.f32 %v539, %v504
    %v555 = vmul.f32 %v543, %v509
    %v556 = vmul.f32 %v547, %v514
    %v557 = vsel %vm258, %v549, 0.0
    %v558 = vrot.slane %v557, 4
    %v559 = vadd.f32 %v557, %v558
    %v560 = vrot.slane %v559, 2
    %v561 = vadd.f32 %v559, %v560
    %v562 = vrot.slane %v561, 1
    %v563 = vadd.f32 %v561, %v562
    %v564 = vsel %vm258, %v550, 0.0
    %v565 = vrot.slane %v564, 4
    %v566 = vadd.f32 %v564, %v565
    %v567 = vrot.slane %v566, 2
    %v568 = vadd.f32 %v566, %v567
    %v569 = vrot.slane %v568, 1
    %v570 = vadd.f32 %v568, %v569
    %v571 = vsel %vm258, %v551, 0.0
    %v572 = vrot.slane %v571, 4
    %v573 = vadd.f32 %v571, %v572
    %v574 = vrot.slane %v573, 2
    %v575 = vadd.f32 %v573, %v574
    %v576 = vrot.slane %v575, 1
    %v577 = vadd.f32 %v575, %v576
    %v578 = vsel %vm258, %v552, 0.0
    %v579 = vrot.slane %v578, 4
    %v580 = vadd.f32 %v578, %v579
    %v581 = vrot.slane %v580, 2
    %v582 = vadd.f32 %v580, %v581
    %v583 = vrot.slane %v582, 1
    %v584 = vadd.f32 %v582, %v583
    %v585 = vsel %vm258, %v553, 0.0
    %v586 = vrot.slane %v585, 4
    %v587 = vadd.f32 %v585, %v586
    %v588 = vrot.slane %v587, 2
    %v589 = vadd.f32 %v587, %v588
    %v590 = vrot.slane %v589, 1
    %v591 = vadd.f32 %v589, %v590
    %v592 = vsel %vm258, %v554, 0.0
    %v593 = vrot.slane %v592, 4
    %v594 = vadd.f32 %v592, %v593
    %v595 = vrot.slane %v594, 2
    %v596 = vadd.f32 %v594, %v595
    %v597 = vrot.slane %v596, 1
    %v598 = vadd.f32 %v596, %v597
    %v599 = vsel %vm258, %v555, 0.0
    %v600 = vrot.slane %v599, 4
    %v601 = vadd.f32 %v599, %v600
    %v602 = vrot.slane %v601, 2
    %v603 = vadd.f32 %v601, %v602
    %v604 = vrot.slane %v603, 1
    %v605 = vadd.f32 %v603, %v604
    %v606 = vsel %vm258, %v556, 0.0
    %v607 = vrot.slane %v606, 4
    %v608 = vadd.f32 %v606, %v607
    %v609 = vrot.slane %v608, 2
    %v610 = vadd.f32 %v608, %v609
    %v611 = vrot.slane %v610, 1
    %v612 = vadd.f32 %v610, %v611
    %613 = vset.pattern.permute.xlu0 3
    %614 = vperm.xlu0 %613, %v122
    %v615 = vpop.permute.xlu0 %614
    %617 = vset.pattern.permute.xlu0 3
    %618 = vperm.xlu0 %617, %v123
    %v619 = vpop.permute.xlu0 %618
    %621 = vset.pattern.permute.xlu0 3
    %622 = vperm.xlu0 %621, %v124
    %v623 = vpop.permute.xlu0 %622
    %625 = vset.pattern.permute.xlu0 3
    %626 = vperm.xlu0 %625, %v125
    %v627 = vpop.permute.xlu0 %626
    %629 = vset.pattern.permute.xlu0 3
    %630 = vperm.xlu0 %629, %v126
    %v631 = vpop.permute.xlu0 %630
    %633 = vset.pattern.permute.xlu0 3
    %634 = vperm.xlu0 %633, %v127
    %v635 = vpop.permute.xlu0 %634
    %637 = vset.pattern.permute.xlu0 3
    %638 = vperm.xlu0 %637, %v128
    %v639 = vpop.permute.xlu0 %638
    %641 = vset.pattern.permute.xlu0 3
    %642 = vperm.xlu0 %641, %v129
    %v643 = vpop.permute.xlu0 %642
    %v645 = vmul.f32 %v615, %v479
    %v646 = vmul.f32 %v619, %v484
    %v647 = vmul.f32 %v623, %v489
    %v648 = vmul.f32 %v627, %v494
    %v649 = vmul.f32 %v631, %v499
    %v650 = vmul.f32 %v635, %v504
    %v651 = vmul.f32 %v639, %v509
    %v652 = vmul.f32 %v643, %v514
    %v653 = vsel %vm258, %v645, 0.0
    %v654 = vrot.slane %v653, 4
    %v655 = vadd.f32 %v653, %v654
    %v656 = vrot.slane %v655, 2
    %v657 = vadd.f32 %v655, %v656
    %v658 = vrot.slane %v657, 1
    %v659 = vadd.f32 %v657, %v658
    %v660 = vsel %vm258, %v646, 0.0
    %v661 = vrot.slane %v660, 4
    %v662 = vadd.f32 %v660, %v661
    %v663 = vrot.slane %v662, 2
    %v664 = vadd.f32 %v662, %v663
    %v665 = vrot.slane %v664, 1
    %v666 = vadd.f32 %v664, %v665
    %v667 = vsel %vm258, %v647, 0.0
    %v668 = vrot.slane %v667, 4
    %v669 = vadd.f32 %v667, %v668
    %v670 = vrot.slane %v669, 2
    %v671 = vadd.f32 %v669, %v670
    %v672 = vrot.slane %v671, 1
    %v673 = vadd.f32 %v671, %v672
    %v674 = vsel %vm258, %v648, 0.0
    %v675 = vrot.slane %v674, 4
    %v676 = vadd.f32 %v674, %v675
    %v677 = vrot.slane %v676, 2
    %v678 = vadd.f32 %v676, %v677
    %v679 = vrot.slane %v678, 1
    %v680 = vadd.f32 %v678, %v679
    %v681 = vsel %vm258, %v649, 0.0
    %v682 = vrot.slane %v681, 4
    %v683 = vadd.f32 %v681, %v682
    %v684 = vrot.slane %v683, 2
    %v685 = vadd.f32 %v683, %v684
    %v686 = vrot.slane %v685, 1
    %v687 = vadd.f32 %v685, %v686
    %v688 = vsel %vm258, %v650, 0.0
    %v689 = vrot.slane %v688, 4
    %v690 = vadd.f32 %v688, %v689
    %v691 = vrot.slane %v690, 2
    %v692 = vadd.f32 %v690, %v691
    %v693 = vrot.slane %v692, 1
    %v694 = vadd.f32 %v692, %v693
    %v695 = vsel %vm258, %v651, 0.0
    %v696 = vrot.slane %v695, 4
    %v697 = vadd.f32 %v695, %v696
    %v698 = vrot.slane %v697, 2
    %v699 = vadd.f32 %v697, %v698
    %v700 = vrot.slane %v699, 1
    %v701 = vadd.f32 %v699, %v700
    %v702 = vsel %vm258, %v652, 0.0
    %v703 = vrot.slane %v702, 4
    %v704 = vadd.f32 %v702, %v703
    %v705 = vrot.slane %v704, 2
    %v706 = vadd.f32 %v704, %v705
    %v707 = vrot.slane %v706, 1
    %v708 = vadd.f32 %v706, %v707
    %vm717 = vcmask 1041409
    %v718 = vsel %vm717, %v666, %v659
    %vm719 = vcmask 1042434
    %v720 = vsel %vm719, %v673, %v718
    %vm721 = vcmask 1043459
    %v722 = vsel %vm721, %v680, %v720
    %vm723 = vcmask 1044484
    %v724 = vsel %vm723, %v687, %v722
    %vm725 = vcmask 1045509
    %v726 = vsel %vm725, %v694, %v724
    %vm727 = vcmask 1046534
    %v728 = vsel %vm727, %v701, %v726
    %vm729 = vcmask 1047559
    %v730 = vsel %vm729, %v708, %v728
    %v731 = vsel %vm258, %v730, 0
    %733 = vmatprep.subr.mxu0 0.0
    %734 = vmatpush1.msra.mxu0 0.0
    %735 = vmatprep.subr.mxu0 0.0
    %736 = vmatpush1.msra.mxu0 0.0
    %737 = vmatprep.subr.mxu0 0.0
    %738 = vmatpush1.msra.mxu0 0.0
    %739 = vmatprep.subr.mxu0 0.0
    %740 = vmatpush1.msra.mxu0 0.0
    %741 = vmatprep.subr.mxu0 0.0
    %742 = vmatpush1.msra.mxu0 0.0
    %743 = vmatprep.subr.mxu0 0.0
    %744 = vmatpush1.msra.mxu0 0.0
    %745 = vmatprep.subr.mxu0 0.0
    %746 = vmatpush1.msra.mxu0 0.0
    %747 = vmatprep.subr.mxu0 0.0
    %748 = vmatpush1.msra.mxu0 0.0
    %749 = vmatprep.subr.mxu0 0.0
    %750 = vmatpush1.msra.mxu0 0.0
    %751 = vmatprep.subr.mxu0 0.0
    %752 = vmatpush1.msra.mxu0 0.0
    %753 = vmatprep.subr.mxu0 0.0
    %754 = vmatpush1.msra.mxu0 0.0
    %755 = vmatprep.subr.mxu0 0.0
    %756 = vmatpush1.msra.mxu0 0.0
    %757 = vmatprep.subr.mxu0 0.0
    %758 = vmatpush1.msra.mxu0 %v156
    %759 = vmatprep.subr.mxu0 0.0
    %760 = vmatpush1.msra.mxu0 %v155
    %761 = vmatprep.subr.mxu0 0.0
    %762 = vmatpush1.msra.mxu0 %v154
    %763 = vmatprep.subr.mxu0 0.0
    %764 = vmatpush1.msra.mxu0 %v153
    %765 = vmatprep.subr.mxu0 0.0
    %766 = vmatpush2.msra.mxu0 0.0
    %767 = vmatprep.subr.mxu0 0.0
    %768 = vmatpush2.msra.mxu0 0.0
    %769 = vmatprep.subr.mxu0 0.0
    %770 = vmatpush2.msra.mxu0 0.0
    %771 = vmatprep.subr.mxu0 0.0
    %772 = vmatpush2.msra.mxu0 0.0
    %773 = vmatprep.subr.mxu0 0.0
    %774 = vmatpush2.msra.mxu0 0.0
    %775 = vmatprep.subr.mxu0 0.0
    %776 = vmatpush2.msra.mxu0 0.0
    %777 = vmatprep.subr.mxu0 0.0
    %778 = vmatpush2.msra.mxu0 0.0
    %779 = vmatprep.subr.mxu0 0.0
    %780 = vmatpush2.msra.mxu0 0.0
    %781 = vmatprep.subr.mxu0 0.0
    %782 = vmatpush2.msra.mxu0 0.0
    %783 = vmatprep.subr.mxu0 0.0
    %784 = vmatpush2.msra.mxu0 0.0
    %785 = vmatprep.subr.mxu0 0.0
    %786 = vmatpush2.msra.mxu0 0.0
    %787 = vmatprep.subr.mxu0 0.0
    %788 = vmatpush2.msra.mxu0 0.0
    %789 = vmatprep.subr.mxu0 0.0
    %790 = vmatpush2.msra.mxu0 0.0
    %791 = vmatprep.subr.mxu0 0.0
    %792 = vmatpush2.msra.mxu0 0.0
    %793 = vmatprep.subr.mxu0 0.0
    %794 = vmatpush2.msra.mxu0 0.0
    %795 = vmatprep.subr.mxu0 0.0
    %796 = vmatpush2.msra.mxu0 0.0
    %797 = vmatprep.mubr.f32.mxu0 0.0
    %798 = vmatmul.mubr.f32.gmra.mxu0 %v731
    %v799 = vpop.f32.mrf.mxu0
    %v800 = vadd.f32 0.0, %v799
    %v801 = vpop.f32.mrf.mxu0
    %802 = vdwg.mxu0
    %v811 = vsel %vm717, %v570, %v563
    %v812 = vsel %vm719, %v577, %v811
    %v813 = vsel %vm721, %v584, %v812
    %v814 = vsel %vm723, %v591, %v813
    %v815 = vsel %vm725, %v598, %v814
    %v816 = vsel %vm727, %v605, %v815
    %v817 = vsel %vm729, %v612, %v816
    %v818 = vsel %vm258, %v817, 0
    %820 = vmatprep.subr.mxu0 0.0
    %821 = vmatpush1.msra.mxu0 0.0
    %822 = vmatprep.subr.mxu0 0.0
    %823 = vmatpush1.msra.mxu0 0.0
    %824 = vmatprep.subr.mxu0 0.0
    %825 = vmatpush1.msra.mxu0 0.0
    %826 = vmatprep.subr.mxu0 0.0
    %827 = vmatpush1.msra.mxu0 0.0
    %828 = vmatprep.subr.mxu0 0.0
    %829 = vmatpush1.msra.mxu0 0.0
    %830 = vmatprep.subr.mxu0 0.0
    %831 = vmatpush1.msra.mxu0 0.0
    %832 = vmatprep.subr.mxu0 0.0
    %833 = vmatpush1.msra.mxu0 0.0
    %834 = vmatprep.subr.mxu0 0.0
    %835 = vmatpush1.msra.mxu0 0.0
    %836 = vmatprep.subr.mxu0 0.0
    %837 = vmatpush1.msra.mxu0 0.0
    %838 = vmatprep.subr.mxu0 0.0
    %839 = vmatpush1.msra.mxu0 0.0
    %840 = vmatprep.subr.mxu0 0.0
    %841 = vmatpush1.msra.mxu0 0.0
    %842 = vmatprep.subr.mxu0 0.0
    %843 = vmatpush1.msra.mxu0 0.0
    %844 = vmatprep.subr.mxu0 0.0
    %845 = vmatpush1.msra.mxu0 %v151
    %846 = vmatprep.subr.mxu0 0.0
    %847 = vmatpush1.msra.mxu0 %v150
    %848 = vmatprep.subr.mxu0 0.0
    %849 = vmatpush1.msra.mxu0 %v149
    %850 = vmatprep.subr.mxu0 0.0
    %851 = vmatpush1.msra.mxu0 %v148
    %852 = vmatprep.subr.mxu0 0.0
    %853 = vmatpush2.msra.mxu0 0.0
    %854 = vmatprep.subr.mxu0 0.0
    %855 = vmatpush2.msra.mxu0 0.0
    %856 = vmatprep.subr.mxu0 0.0
    %857 = vmatpush2.msra.mxu0 0.0
    %858 = vmatprep.subr.mxu0 0.0
    %859 = vmatpush2.msra.mxu0 0.0
    %860 = vmatprep.subr.mxu0 0.0
    %861 = vmatpush2.msra.mxu0 0.0
    %862 = vmatprep.subr.mxu0 0.0
    %863 = vmatpush2.msra.mxu0 0.0
    %864 = vmatprep.subr.mxu0 0.0
    %865 = vmatpush2.msra.mxu0 0.0
    %866 = vmatprep.subr.mxu0 0.0
    %867 = vmatpush2.msra.mxu0 0.0
    %868 = vmatprep.subr.mxu0 0.0
    %869 = vmatpush2.msra.mxu0 0.0
    %870 = vmatprep.subr.mxu0 0.0
    %871 = vmatpush2.msra.mxu0 0.0
    %872 = vmatprep.subr.mxu0 0.0
    %873 = vmatpush2.msra.mxu0 0.0
    %874 = vmatprep.subr.mxu0 0.0
    %875 = vmatpush2.msra.mxu0 0.0
    %876 = vmatprep.subr.mxu0 0.0
    %877 = vmatpush2.msra.mxu0 0.0
    %878 = vmatprep.subr.mxu0 0.0
    %879 = vmatpush2.msra.mxu0 0.0
    %880 = vmatprep.subr.mxu0 0.0
    %881 = vmatpush2.msra.mxu0 0.0
    %882 = vmatprep.subr.mxu0 0.0
    %883 = vmatpush2.msra.mxu0 0.0
    %884 = vmatprep.mubr.f32.mxu0 0.0
    %885 = vmatmul.mubr.f32.gmra.mxu0 %v818
    %v886 = vpop.f32.mrf.mxu0
    %v887 = vadd.f32 %v800, %v886
    %v888 = vpop.f32.mrf.mxu0
    %889 = vdwg.mxu0
    %890 = vst.msk [vmem:[#allocation2] sm:$0xff] %vm258, %v887
    %v891 = vld [vmem:[%s2] sm:$0x1]
    %v892 = vld [vmem:[#allocation2] sm:$0x1]
    %v894 = vsel %vm258, %v891, 0
    %896 = vmatprep.subr.mxu0 0.0
    %897 = vmatpush1.msra.mxu0 0.0
    %898 = vmatprep.subr.mxu0 0.0
    %899 = vmatpush1.msra.mxu0 0.0
    %900 = vmatprep.subr.mxu0 0.0
    %901 = vmatpush1.msra.mxu0 0.0
    %902 = vmatprep.subr.mxu0 0.0
    %903 = vmatpush1.msra.mxu0 0.0
    %904 = vmatprep.subr.mxu0 0.0
    %905 = vmatpush1.msra.mxu0 0.0
    %906 = vmatprep.subr.mxu0 0.0
    %907 = vmatpush1.msra.mxu0 0.0
    %908 = vmatprep.subr.mxu0 0.0
    %909 = vmatpush1.msra.mxu0 0.0
    %910 = vmatprep.subr.mxu0 0.0
    %911 = vmatpush1.msra.mxu0 0.0
    %912 = vmatprep.subr.mxu0 0.0
    %913 = vmatpush1.msra.mxu0 0.0
    %914 = vmatprep.subr.mxu0 0.0
    %915 = vmatpush1.msra.mxu0 0.0
    %916 = vmatprep.subr.mxu0 0.0
    %917 = vmatpush1.msra.mxu0 0.0
    %918 = vmatprep.subr.mxu0 0.0
    %919 = vmatpush1.msra.mxu0 0.0
    %920 = vmatprep.subr.mxu0 0.0
    %921 = vmatpush1.msra.mxu0 %v161
    %922 = vmatprep.subr.mxu0 0.0
    %923 = vmatpush1.msra.mxu0 %v160
    %924 = vmatprep.subr.mxu0 0.0
    %925 = vmatpush1.msra.mxu0 %v159
    %926 = vmatprep.subr.mxu0 0.0
    %927 = vmatpush1.msra.mxu0 %v158
    %928 = vmatprep.subr.mxu0 0.0
    %929 = vmatpush2.msra.mxu0 0.0
    %930 = vmatprep.subr.mxu0 0.0
    %931 = vmatpush2.msra.mxu0 0.0
    %932 = vmatprep.subr.mxu0 0.0
    %933 = vmatpush2.msra.mxu0 0.0
    %934 = vmatprep.subr.mxu0 0.0
    %935 = vmatpush2.msra.mxu0 0.0
    %936 = vmatprep.subr.mxu0 0.0
    %937 = vmatpush2.msra.mxu0 0.0
    %938 = vmatprep.subr.mxu0 0.0
    %939 = vmatpush2.msra.mxu0 0.0
    %940 = vmatprep.subr.mxu0 0.0
    %941 = vmatpush2.msra.mxu0 0.0
    %942 = vmatprep.subr.mxu0 0.0
    %943 = vmatpush2.msra.mxu0 0.0
    %944 = vmatprep.subr.mxu0 0.0
    %945 = vmatpush2.msra.mxu0 0.0
    %946 = vmatprep.subr.mxu0 0.0
    %947 = vmatpush2.msra.mxu0 0.0
    %948 = vmatprep.subr.mxu0 0.0
    %949 = vmatpush2.msra.mxu0 0.0
    %950 = vmatprep.subr.mxu0 0.0
    %951 = vmatpush2.msra.mxu0 0.0
    %952 = vmatprep.subr.mxu0 0.0
    %953 = vmatpush2.msra.mxu0 0.0
    %954 = vmatprep.subr.mxu0 0.0
    %955 = vmatpush2.msra.mxu0 0.0
    %956 = vmatprep.subr.mxu0 0.0
    %957 = vmatpush2.msra.mxu0 0.0
    %958 = vmatprep.subr.mxu0 0.0
    %959 = vmatpush2.msra.mxu0 0.0
    %960 = vmatprep.mubr.f32.mxu0 0.0
    %961 = vmatmul.mubr.f32.gmra.mxu0 %v894
    %v962 = vpop.f32.mrf.mxu0
    %v963 = vadd.f32 0.0, %v962
    %v964 = vpop.f32.mrf.mxu0
    %965 = vdwg.mxu0
    %v966 = vadd.f32 %v892, %v963
    %v967 = vxor.u32 %v966, 2147483648
    %v968 = vmul.f32 %v967, 1.442695
    %v969 = vpow.pop %v968
    %v970 = vadd.f32 %v969, 1.0
    %v971 = vrcp.pop %v970
    %v972 = vmul.f32 1.0, %v971
    %vm973 = vcmask 253952
    %974 = vst.msk [vmem:[#allocation3] sm:$0x1] %vm973, %v972
    %v975 = vld [vmem:[#allocation2 + $0x1] sm:$0x1]
    %v977 = vsel %vm258, %v972, 0
    %979 = vmatprep.subr.mxu0 0.0
    %980 = vmatpush1.msra.mxu0 0.0
    %981 = vmatprep.subr.mxu0 0.0
    %982 = vmatpush1.msra.mxu0 0.0
    %983 = vmatprep.subr.mxu0 0.0
    %984 = vmatpush1.msra.mxu0 0.0
    %985 = vmatprep.subr.mxu0 0.0
    %986 = vmatpush1.msra.mxu0 0.0
    %987 = vmatprep.subr.mxu0 0.0
    %988 = vmatpush1.msra.mxu0 0.0
    %989 = vmatprep.subr.mxu0 0.0
    %990 = vmatpush1.msra.mxu0 0.0
    %991 = vmatprep.subr.mxu0 0.0
    %992 = vmatpush1.msra.mxu0 0.0
    %993 = vmatprep.subr.mxu0 0.0
    %994 = vmatpush1.msra.mxu0 0.0
    %995 = vmatprep.subr.mxu0 0.0
    %996 = vmatpush1.msra.mxu0 0.0
    %997 = vmatprep.subr.mxu0 0.0
    %998 = vmatpush1.msra.mxu0 0.0
    %999 = vmatprep.subr.mxu0 0.0
    %1000 = vmatpush1.msra.mxu0 0.0
    %1001 = vmatprep.subr.mxu0 0.0
    %1002 = vmatpush1.msra.mxu0 0.0
    %1003 = vmatprep.subr.mxu0 0.0
    %1004 = vmatpush1.msra.mxu0 %v161
    %1005 = vmatprep.subr.mxu0 0.0
    %1006 = vmatpush1.msra.mxu0 %v160
    %1007 = vmatprep.subr.mxu0 0.0
    %1008 = vmatpush1.msra.mxu0 %v159
    %1009 = vmatprep.subr.mxu0 0.0
    %1010 = vmatpush1.msra.mxu0 %v158
    %1011 = vmatprep.subr.mxu0 0.0
    %1012 = vmatpush2.msra.mxu0 0.0
    %1013 = vmatprep.subr.mxu0 0.0
    %1014 = vmatpush2.msra.mxu0 0.0
    %1015 = vmatprep.subr.mxu0 0.0
    %1016 = vmatpush2.msra.mxu0 0.0
    %1017 = vmatprep.subr.mxu0 0.0
    %1018 = vmatpush2.msra.mxu0 0.0
    %1019 = vmatprep.subr.mxu0 0.0
    %1020 = vmatpush2.msra.mxu0 0.0
    %1021 = vmatprep.subr.mxu0 0.0
    %1022 = vmatpush2.msra.mxu0 0.0
    %1023 = vmatprep.subr.mxu0 0.0
    %1024 = vmatpush2.msra.mxu0 0.0
    %1025 = vmatprep.subr.mxu0 0.0
    %1026 = vmatpush2.msra.mxu0 0.0
    %1027 = vmatprep.subr.mxu0 0.0
    %1028 = vmatpush2.msra.mxu0 0.0
    %1029 = vmatprep.subr.mxu0 0.0
    %1030 = vmatpush2.msra.mxu0 0.0
    %1031 = vmatprep.subr.mxu0 0.0
    %1032 = vmatpush2.msra.mxu0 0.0
    %1033 = vmatprep.subr.mxu0 0.0
    %1034 = vmatpush2.msra.mxu0 0.0
    %1035 = vmatprep.subr.mxu0 0.0
    %1036 = vmatpush2.msra.mxu0 0.0
    %1037 = vmatprep.subr.mxu0 0.0
    %1038 = vmatpush2.msra.mxu0 0.0
    %1039 = vmatprep.subr.mxu0 0.0
    %1040 = vmatpush2.msra.mxu0 0.0
    %1041 = vmatprep.subr.mxu0 0.0
    %1042 = vmatpush2.msra.mxu0 0.0
    %1043 = vmatprep.mubr.f32.mxu0 0.0
    %1044 = vmatmul.mubr.f32.gmra.mxu0 %v977
    %v1045 = vpop.f32.mrf.mxu0
    %v1046 = vadd.f32 0.0, %v1045
    %v1047 = vpop.f32.mrf.mxu0
    %1048 = vdwg.mxu0
    %v1049 = vadd.f32 %v975, %v1046
    %v1050 = vxor.u32 %v1049, 2147483648
    %v1051 = vmul.f32 %v1050, 1.442695
    %v1052 = vpow.pop %v1051
    %v1053 = vadd.f32 %v1052, 1.0
    %v1054 = vrcp.pop %v1053
    %v1055 = vmul.f32 1.0, %v1054
    %1056 = vst.msk [vmem:[#allocation3 + $0x1] sm:$0x1] %vm973, %v1055
    %v1057 = vld [vmem:[#allocation2 + $0x2] sm:$0x1]
    %v1059 = vsel %vm258, %v1055, 0
    %1061 = vmatprep.subr.mxu0 0.0
    %1062 = vmatpush1.msra.mxu0 0.0
    %1063 = vmatprep.subr.mxu0 0.0
    %1064 = vmatpush1.msra.mxu0 0.0
    %1065 = vmatprep.subr.mxu0 0.0
    %1066 = vmatpush1.msra.mxu0 0.0
    %1067 = vmatprep.subr.mxu0 0.0
    %1068 = vmatpush1.msra.mxu0 0.0
    %1069 = vmatprep.subr.mxu0 0.0
    %1070 = vmatpush1.msra.mxu0 0.0
    %1071 = vmatprep.subr.mxu0 0.0
    %1072 = vmatpush1.msra.mxu0 0.0
    %1073 = vmatprep.subr.mxu0 0.0
    %1074 = vmatpush1.msra.mxu0 0.0
    %1075 = vmatprep.subr.mxu0 0.0
    %1076 = vmatpush1.msra.mxu0 0.0
    %1077 = vmatprep.subr.mxu0 0.0
    %1078 = vmatpush1.msra.mxu0 0.0
    %1079 = vmatprep.subr.mxu0 0.0
    %1080 = vmatpush1.msra.mxu0 0.0
    %1081 = vmatprep.subr.mxu0 0.0
    %1082 = vmatpush1.msra.mxu0 0.0
    %1083 = vmatprep.subr.mxu0 0.0
    %1084 = vmatpush1.msra.mxu0 0.0
    %1085 = vmatprep.subr.mxu0 0.0
    %1086 = vmatpush1.msra.mxu0 %v161
    %1087 = vmatprep.subr.mxu0 0.0
    %1088 = vmatpush1.msra.mxu0 %v160
    %1089 = vmatprep.subr.mxu0 0.0
    %1090 = vmatpush1.msra.mxu0 %v159
    %1091 = vmatprep.subr.mxu0 0.0
    %1092 = vmatpush1.msra.mxu0 %v158
    %1093 = vmatprep.subr.mxu0 0.0
    %1094 = vmatpush2.msra.mxu0 0.0
    %1095 = vmatprep.subr.mxu0 0.0
    %1096 = vmatpush2.msra.mxu0 0.0
    %1097 = vmatprep.subr.mxu0 0.0
    %1098 = vmatpush2.msra.mxu0 0.0
    %1099 = vmatprep.subr.mxu0 0.0
    %1100 = vmatpush2.msra.mxu0 0.0
    %1101 = vmatprep.subr.mxu0 0.0
    %1102 = vmatpush2.msra.mxu0 0.0
    %1103 = vmatprep.subr.mxu0 0.0
    %1104 = vmatpush2.msra.mxu0 0.0
    %1105 = vmatprep.subr.mxu0 0.0
    %1106 = vmatpush2.msra.mxu0 0.0
    %1107 = vmatprep.subr.mxu0 0.0
    %1108 = vmatpush2.msra.mxu0 0.0
    %1109 = vmatprep.subr.mxu0 0.0
    %1110 = vmatpush2.msra.mxu0 0.0
    %1111 = vmatprep.subr.mxu0 0.0
    %1112 = vmatpush2.msra.mxu0 0.0
    %1113 = vmatprep.subr.mxu0 0.0
    %1114 = vmatpush2.msra.mxu0 0.0
    %1115 = vmatprep.subr.mxu0 0.0
    %1116 = vmatpush2.msra.mxu0 0.0
    %1117 = vmatprep.subr.mxu0 0.0
    %1118 = vmatpush2.msra.mxu0 0.0
    %1119 = vmatprep.subr.mxu0 0.0
    %1120 = vmatpush2.msra.mxu0 0.0
    %1121 = vmatprep.subr.mxu0 0.0
    %1122 = vmatpush2.msra.mxu0 0.0
    %1123 = vmatprep.subr.mxu0 0.0
    %1124 = vmatpush2.msra.mxu0 0.0
    %1125 = vmatprep.mubr.f32.mxu0 0.0
    %1126 = vmatmul.mubr.f32.gmra.mxu0 %v1059
    %v1127 = vpop.f32.mrf.mxu0
    %v1128 = vadd.f32 0.0, %v1127
    %v1129 = vpop.f32.mrf.mxu0
    %1130 = vdwg.mxu0
    %v1131 = vadd.f32 %v1057, %v1128
    %v1132 = vxor.u32 %v1131, 2147483648
    %v1133 = vmul.f32 %v1132, 1.442695
    %v1134 = vpow.pop %v1133
    %v1135 = vadd.f32 %v1134, 1.0
    %v1136 = vrcp.pop %v1135
    %v1137 = vmul.f32 1.0, %v1136
    %1138 = vst.msk [vmem:[#allocation3 + $0x2] sm:$0x1] %vm973, %v1137
    %v1139 = vld [vmem:[#allocation2 + $0x3] sm:$0x1]
    %v1141 = vsel %vm258, %v1137, 0
    %1143 = vmatprep.subr.mxu0 0.0
    %1144 = vmatpush1.msra.mxu0 0.0
    %1145 = vmatprep.subr.mxu0 0.0
    %1146 = vmatpush1.msra.mxu0 0.0
    %1147 = vmatprep.subr.mxu0 0.0
    %1148 = vmatpush1.msra.mxu0 0.0
    %1149 = vmatprep.subr.mxu0 0.0
    %1150 = vmatpush1.msra.mxu0 0.0
    %1151 = vmatprep.subr.mxu0 0.0
    %1152 = vmatpush1.msra.mxu0 0.0
    %1153 = vmatprep.subr.mxu0 0.0
    %1154 = vmatpush1.msra.mxu0 0.0
    %1155 = vmatprep.subr.mxu0 0.0
    %1156 = vmatpush1.msra.mxu0 0.0
    %1157 = vmatprep.subr.mxu0 0.0
    %1158 = vmatpush1.msra.mxu0 0.0
    %1159 = vmatprep.subr.mxu0 0.0
    %1160 = vmatpush1.msra.mxu0 0.0
    %1161 = vmatprep.subr.mxu0 0.0
    %1162 = vmatpush1.msra.mxu0 0.0
    %1163 = vmatprep.subr.mxu0 0.0
    %1164 = vmatpush1.msra.mxu0 0.0
    %1165 = vmatprep.subr.mxu0 0.0
    %1166 = vmatpush1.msra.mxu0 0.0
    %1167 = vmatprep.subr.mxu0 0.0
    %1168 = vmatpush1.msra.mxu0 %v161
    %1169 = vmatprep.subr.mxu0 0.0
    %1170 = vmatpush1.msra.mxu0 %v160
    %1171 = vmatprep.subr.mxu0 0.0
    %1172 = vmatpush1.msra.mxu0 %v159
    %1173 = vmatprep.subr.mxu0 0.0
    %1174 = vmatpush1.msra.mxu0 %v158
    %1175 = vmatprep.subr.mxu0 0.0
    %1176 = vmatpush2.msra.mxu0 0.0
    %1177 = vmatprep.subr.mxu0 0.0
    %1178 = vmatpush2.msra.mxu0 0.0
    %1179 = vmatprep.subr.mxu0 0.0
    %1180 = vmatpush2.msra.mxu0 0.0
    %1181 = vmatprep.subr.mxu0 0.0
    %1182 = vmatpush2.msra.mxu0 0.0
    %1183 = vmatprep.subr.mxu0 0.0
    %1184 = vmatpush2.msra.mxu0 0.0
    %1185 = vmatprep.subr.mxu0 0.0
    %1186 = vmatpush2.msra.mxu0 0.0
    %1187 = vmatprep.subr.mxu0 0.0
    %1188 = vmatpush2.msra.mxu0 0.0
    %1189 = vmatprep.subr.mxu0 0.0
    %1190 = vmatpush2.msra.mxu0 0.0
    %1191 = vmatprep.subr.mxu0 0.0
    %1192 = vmatpush2.msra.mxu0 0.0
    %1193 = vmatprep.subr.mxu0 0.0
    %1194 = vmatpush2.msra.mxu0 0.0
    %1195 = vmatprep.subr.mxu0 0.0
    %1196 = vmatpush2.msra.mxu0 0.0
    %1197 = vmatprep.subr.mxu0 0.0
    %1198 = vmatpush2.msra.mxu0 0.0
    %1199 = vmatprep.subr.mxu0 0.0
    %1200 = vmatpush2.msra.mxu0 0.0
    %1201 = vmatprep.subr.mxu0 0.0
    %1202 = vmatpush2.msra.mxu0 0.0
    %1203 = vmatprep.subr.mxu0 0.0
    %1204 = vmatpush2.msra.mxu0 0.0
    %1205 = vmatprep.subr.mxu0 0.0
    %1206 = vmatpush2.msra.mxu0 0.0
    %1207 = vmatprep.mubr.f32.mxu0 0.0
    %1208 = vmatmul.mubr.f32.gmra.mxu0 %v1141
    %v1209 = vpop.f32.mrf.mxu0
    %v1210 = vadd.f32 0.0, %v1209
    %v1211 = vpop.f32.mrf.mxu0
    %1212 = vdwg.mxu0
    %v1213 = vadd.f32 %v1139, %v1210
    %v1214 = vxor.u32 %v1213, 2147483648
    %v1215 = vmul.f32 %v1214, 1.442695
    %v1216 = vpow.pop %v1215
    %v1217 = vadd.f32 %v1216, 1.0
    %v1218 = vrcp.pop %v1217
    %v1219 = vmul.f32 1.0, %v1218
    %1220 = vst.msk [vmem:[#allocation3 + $0x3] sm:$0x1] %vm973, %v1219
    %v1221 = vld [vmem:[#allocation2 + $0x4] sm:$0x1]
    %v1223 = vsel %vm258, %v1219, 0
    %1225 = vmatprep.subr.mxu0 0.0
    %1226 = vmatpush1.msra.mxu0 0.0
    %1227 = vmatprep.subr.mxu0 0.0
    %1228 = vmatpush1.msra.mxu0 0.0
    %1229 = vmatprep.subr.mxu0 0.0
    %1230 = vmatpush1.msra.mxu0 0.0
    %1231 = vmatprep.subr.mxu0 0.0
    %1232 = vmatpush1.msra.mxu0 0.0
    %1233 = vmatprep.subr.mxu0 0.0
    %1234 = vmatpush1.msra.mxu0 0.0
    %1235 = vmatprep.subr.mxu0 0.0
    %1236 = vmatpush1.msra.mxu0 0.0
    %1237 = vmatprep.subr.mxu0 0.0
    %1238 = vmatpush1.msra.mxu0 0.0
    %1239 = vmatprep.subr.mxu0 0.0
    %1240 = vmatpush1.msra.mxu0 0.0
    %1241 = vmatprep.subr.mxu0 0.0
    %1242 = vmatpush1.msra.mxu0 0.0
    %1243 = vmatprep.subr.mxu0 0.0
    %1244 = vmatpush1.msra.mxu0 0.0
    %1245 = vmatprep.subr.mxu0 0.0
    %1246 = vmatpush1.msra.mxu0 0.0
    %1247 = vmatprep.subr.mxu0 0.0
    %1248 = vmatpush1.msra.mxu0 0.0
    %1249 = vmatprep.subr.mxu0 0.0
    %1250 = vmatpush1.msra.mxu0 %v161
    %1251 = vmatprep.subr.mxu0 0.0
    %1252 = vmatpush1.msra.mxu0 %v160
    %1253 = vmatprep.subr.mxu0 0.0
    %1254 = vmatpush1.msra.mxu0 %v159
    %1255 = vmatprep.subr.mxu0 0.0
    %1256 = vmatpush1.msra.mxu0 %v158
    %1257 = vmatprep.subr.mxu0 0.0
    %1258 = vmatpush2.msra.mxu0 0.0
    %1259 = vmatprep.subr.mxu0 0.0
    %1260 = vmatpush2.msra.mxu0 0.0
    %1261 = vmatprep.subr.mxu0 0.0
    %1262 = vmatpush2.msra.mxu0 0.0
    %1263 = vmatprep.subr.mxu0 0.0
    %1264 = vmatpush2.msra.mxu0 0.0
    %1265 = vmatprep.subr.mxu0 0.0
    %1266 = vmatpush2.msra.mxu0 0.0
    %1267 = vmatprep.subr.mxu0 0.0
    %1268 = vmatpush2.msra.mxu0 0.0
    %1269 = vmatprep.subr.mxu0 0.0
    %1270 = vmatpush2.msra.mxu0 0.0
    %1271 = vmatprep.subr.mxu0 0.0
    %1272 = vmatpush2.msra.mxu0 0.0
    %1273 = vmatprep.subr.mxu0 0.0
    %1274 = vmatpush2.msra.mxu0 0.0
    %1275 = vmatprep.subr.mxu0 0.0
    %1276 = vmatpush2.msra.mxu0 0.0
    %1277 = vmatprep.subr.mxu0 0.0
    %1278 = vmatpush2.msra.mxu0 0.0
    %1279 = vmatprep.subr.mxu0 0.0
    %1280 = vmatpush2.msra.mxu0 0.0
    %1281 = vmatprep.subr.mxu0 0.0
    %1282 = vmatpush2.msra.mxu0 0.0
    %1283 = vmatprep.subr.mxu0 0.0
    %1284 = vmatpush2.msra.mxu0 0.0
    %1285 = vmatprep.subr.mxu0 0.0
    %1286 = vmatpush2.msra.mxu0 0.0
    %1287 = vmatprep.subr.mxu0 0.0
    %1288 = vmatpush2.msra.mxu0 0.0
    %1289 = vmatprep.mubr.f32.mxu0 0.0
    %1290 = vmatmul.mubr.f32.gmra.mxu0 %v1223
    %v1291 = vpop.f32.mrf.mxu0
    %v1292 = vadd.f32 0.0, %v1291
    %v1293 = vpop.f32.mrf.mxu0
    %1294 = vdwg.mxu0
    %v1295 = vadd.f32 %v1221, %v1292
    %v1296 = vxor.u32 %v1295, 2147483648
    %v1297 = vmul.f32 %v1296, 1.442695
    %v1298 = vpow.pop %v1297
    %v1299 = vadd.f32 %v1298, 1.0
    %v1300 = vrcp.pop %v1299
    %v1301 = vmul.f32 1.0, %v1300
    %1302 = vst.msk [vmem:[#allocation3 + $0x4] sm:$0x1] %vm973, %v1301
    %v1303 = vld [vmem:[#allocation2 + $0x5] sm:$0x1]
    %v1305 = vsel %vm258, %v1301, 0
    %1307 = vmatprep.subr.mxu0 0.0
    %1308 = vmatpush1.msra.mxu0 0.0
    %1309 = vmatprep.subr.mxu0 0.0
    %1310 = vmatpush1.msra.mxu0 0.0
    %1311 = vmatprep.subr.mxu0 0.0
    %1312 = vmatpush1.msra.mxu0 0.0
    %1313 = vmatprep.subr.mxu0 0.0
    %1314 = vmatpush1.msra.mxu0 0.0
    %1315 = vmatprep.subr.mxu0 0.0
    %1316 = vmatpush1.msra.mxu0 0.0
    %1317 = vmatprep.subr.mxu0 0.0
    %1318 = vmatpush1.msra.mxu0 0.0
    %1319 = vmatprep.subr.mxu0 0.0
    %1320 = vmatpush1.msra.mxu0 0.0
    %1321 = vmatprep.subr.mxu0 0.0
    %1322 = vmatpush1.msra.mxu0 0.0
    %1323 = vmatprep.subr.mxu0 0.0
    %1324 = vmatpush1.msra.mxu0 0.0
    %1325 = vmatprep.subr.mxu0 0.0
    %1326 = vmatpush1.msra.mxu0 0.0
    %1327 = vmatprep.subr.mxu0 0.0
    %1328 = vmatpush1.msra.mxu0 0.0
    %1329 = vmatprep.subr.mxu0 0.0
    %1330 = vmatpush1.msra.mxu0 0.0
    %1331 = vmatprep.subr.mxu0 0.0
    %1332 = vmatpush1.msra.mxu0 %v161
    %1333 = vmatprep.subr.mxu0 0.0
    %1334 = vmatpush1.msra.mxu0 %v160
    %1335 = vmatprep.subr.mxu0 0.0
    %1336 = vmatpush1.msra.mxu0 %v159
    %1337 = vmatprep.subr.mxu0 0.0
    %1338 = vmatpush1.msra.mxu0 %v158
    %1339 = vmatprep.subr.mxu0 0.0
    %1340 = vmatpush2.msra.mxu0 0.0
    %1341 = vmatprep.subr.mxu0 0.0
    %1342 = vmatpush2.msra.mxu0 0.0
    %1343 = vmatprep.subr.mxu0 0.0
    %1344 = vmatpush2.msra.mxu0 0.0
    %1345 = vmatprep.subr.mxu0 0.0
    %1346 = vmatpush2.msra.mxu0 0.0
    %1347 = vmatprep.subr.mxu0 0.0
    %1348 = vmatpush2.msra.mxu0 0.0
    %1349 = vmatprep.subr.mxu0 0.0
    %1350 = vmatpush2.msra.mxu0 0.0
    %1351 = vmatprep.subr.mxu0 0.0
    %1352 = vmatpush2.msra.mxu0 0.0
    %1353 = vmatprep.subr.mxu0 0.0
    %1354 = vmatpush2.msra.mxu0 0.0
    %1355 = vmatprep.subr.mxu0 0.0
    %1356 = vmatpush2.msra.mxu0 0.0
    %1357 = vmatprep.subr.mxu0 0.0
    %1358 = vmatpush2.msra.mxu0 0.0
    %1359 = vmatprep.subr.mxu0 0.0
    %1360 = vmatpush2.msra.mxu0 0.0
    %1361 = vmatprep.subr.mxu0 0.0
    %1362 = vmatpush2.msra.mxu0 0.0
    %1363 = vmatprep.subr.mxu0 0.0
    %1364 = vmatpush2.msra.mxu0 0.0
    %1365 = vmatprep.subr.mxu0 0.0
    %1366 = vmatpush2.msra.mxu0 0.0
    %1367 = vmatprep.subr.mxu0 0.0
    %1368 = vmatpush2.msra.mxu0 0.0
    %1369 = vmatprep.subr.mxu0 0.0
    %1370 = vmatpush2.msra.mxu0 0.0
    %1371 = vmatprep.mubr.f32.mxu0 0.0
    %1372 = vmatmul.mubr.f32.gmra.mxu0 %v1305
    %v1373 = vpop.f32.mrf.mxu0
    %v1374 = vadd.f32 0.0, %v1373
    %v1375 = vpop.f32.mrf.mxu0
    %1376 = vdwg.mxu0
    %v1377 = vadd.f32 %v1303, %v1374
    %v1378 = vxor.u32 %v1377, 2147483648
    %v1379 = vmul.f32 %v1378, 1.442695
    %v1380 = vpow.pop %v1379
    %v1381 = vadd.f32 %v1380, 1.0
    %v1382 = vrcp.pop %v1381
    %v1383 = vmul.f32 1.0, %v1382
    %1384 = vst.msk [vmem:[#allocation3 + $0x5] sm:$0x1] %vm973, %v1383
    %v1385 = vld [vmem:[#allocation2 + $0x6] sm:$0x1]
    %v1387 = vsel %vm258, %v1383, 0
    %1389 = vmatprep.subr.mxu0 0.0
    %1390 = vmatpush1.msra.mxu0 0.0
    %1391 = vmatprep.subr.mxu0 0.0
    %1392 = vmatpush1.msra.mxu0 0.0
    %1393 = vmatprep.subr.mxu0 0.0
    %1394 = vmatpush1.msra.mxu0 0.0
    %1395 = vmatprep.subr.mxu0 0.0
    %1396 = vmatpush1.msra.mxu0 0.0
    %1397 = vmatprep.subr.mxu0 0.0
    %1398 = vmatpush1.msra.mxu0 0.0
    %1399 = vmatprep.subr.mxu0 0.0
    %1400 = vmatpush1.msra.mxu0 0.0
    %1401 = vmatprep.subr.mxu0 0.0
    %1402 = vmatpush1.msra.mxu0 0.0
    %1403 = vmatprep.subr.mxu0 0.0
    %1404 = vmatpush1.msra.mxu0 0.0
    %1405 = vmatprep.subr.mxu0 0.0
    %1406 = vmatpush1.msra.mxu0 0.0
    %1407 = vmatprep.subr.mxu0 0.0
    %1408 = vmatpush1.msra.mxu0 0.0
    %1409 = vmatprep.subr.mxu0 0.0
    %1410 = vmatpush1.msra.mxu0 0.0
    %1411 = vmatprep.subr.mxu0 0.0
    %1412 = vmatpush1.msra.mxu0 0.0
    %1413 = vmatprep.subr.mxu0 0.0
    %1414 = vmatpush1.msra.mxu0 %v161
    %1415 = vmatprep.subr.mxu0 0.0
    %1416 = vmatpush1.msra.mxu0 %v160
    %1417 = vmatprep.subr.mxu0 0.0
    %1418 = vmatpush1.msra.mxu0 %v159
    %1419 = vmatprep.subr.mxu0 0.0
    %1420 = vmatpush1.msra.mxu0 %v158
    %1421 = vmatprep.subr.mxu0 0.0
    %1422 = vmatpush2.msra.mxu0 0.0
    %1423 = vmatprep.subr.mxu0 0.0
    %1424 = vmatpush2.msra.mxu0 0.0
    %1425 = vmatprep.subr.mxu0 0.0
    %1426 = vmatpush2.msra.mxu0 0.0
    %1427 = vmatprep.subr.mxu0 0.0
    %1428 = vmatpush2.msra.mxu0 0.0
    %1429 = vmatprep.subr.mxu0 0.0
    %1430 = vmatpush2.msra.mxu0 0.0
    %1431 = vmatprep.subr.mxu0 0.0
    %1432 = vmatpush2.msra.mxu0 0.0
    %1433 = vmatprep.subr.mxu0 0.0
    %1434 = vmatpush2.msra.mxu0 0.0
    %1435 = vmatprep.subr.mxu0 0.0
    %1436 = vmatpush2.msra.mxu0 0.0
    %1437 = vmatprep.subr.mxu0 0.0
    %1438 = vmatpush2.msra.mxu0 0.0
    %1439 = vmatprep.subr.mxu0 0.0
    %1440 = vmatpush2.msra.mxu0 0.0
    %1441 = vmatprep.subr.mxu0 0.0
    %1442 = vmatpush2.msra.mxu0 0.0
    %1443 = vmatprep.subr.mxu0 0.0
    %1444 = vmatpush2.msra.mxu0 0.0
    %1445 = vmatprep.subr.mxu0 0.0
    %1446 = vmatpush2.msra.mxu0 0.0
    %1447 = vmatprep.subr.mxu0 0.0
    %1448 = vmatpush2.msra.mxu0 0.0
    %1449 = vmatprep.subr.mxu0 0.0
    %1450 = vmatpush2.msra.mxu0 0.0
    %1451 = vmatprep.subr.mxu0 0.0
    %1452 = vmatpush2.msra.mxu0 0.0
    %1453 = vmatprep.mubr.f32.mxu0 0.0
    %1454 = vmatmul.mubr.f32.gmra.mxu0 %v1387
    %v1455 = vpop.f32.mrf.mxu0
    %v1456 = vadd.f32 0.0, %v1455
    %v1457 = vpop.f32.mrf.mxu0
    %1458 = vdwg.mxu0
    %v1459 = vadd.f32 %v1385, %v1456
    %v1460 = vxor.u32 %v1459, 2147483648
    %v1461 = vmul.f32 %v1460, 1.442695
    %v1462 = vpow.pop %v1461
    %v1463 = vadd.f32 %v1462, 1.0
    %v1464 = vrcp.pop %v1463
    %v1465 = vmul.f32 1.0, %v1464
    %1466 = vst.msk [vmem:[#allocation3 + $0x6] sm:$0x1] %vm973, %v1465
    %v1467 = vld [vmem:[#allocation2 + $0x7] sm:$0x1]
    %v1469 = vsel %vm258, %v1465, 0
    %1471 = vmatprep.subr.mxu0 0.0
    %1472 = vmatpush1.msra.mxu0 0.0
    %1473 = vmatprep.subr.mxu0 0.0
    %1474 = vmatpush1.msra.mxu0 0.0
    %1475 = vmatprep.subr.mxu0 0.0
    %1476 = vmatpush1.msra.mxu0 0.0
    %1477 = vmatprep.subr.mxu0 0.0
    %1478 = vmatpush1.msra.mxu0 0.0
    %1479 = vmatprep.subr.mxu0 0.0
    %1480 = vmatpush1.msra.mxu0 0.0
    %1481 = vmatprep.subr.mxu0 0.0
    %1482 = vmatpush1.msra.mxu0 0.0
    %1483 = vmatprep.subr.mxu0 0.0
    %1484 = vmatpush1.msra.mxu0 0.0
    %1485 = vmatprep.subr.mxu0 0.0
    %1486 = vmatpush1.msra.mxu0 0.0
    %1487 = vmatprep.subr.mxu0 0.0
    %1488 = vmatpush1.msra.mxu0 0.0
    %1489 = vmatprep.subr.mxu0 0.0
    %1490 = vmatpush1.msra.mxu0 0.0
    %1491 = vmatprep.subr.mxu0 0.0
    %1492 = vmatpush1.msra.mxu0 0.0
    %1493 = vmatprep.subr.mxu0 0.0
    %1494 = vmatpush1.msra.mxu0 0.0
    %1495 = vmatprep.subr.mxu0 0.0
    %1496 = vmatpush1.msra.mxu0 %v161
    %1497 = vmatprep.subr.mxu0 0.0
    %1498 = vmatpush1.msra.mxu0 %v160
    %1499 = vmatprep.subr.mxu0 0.0
    %1500 = vmatpush1.msra.mxu0 %v159
    %1501 = vmatprep.subr.mxu0 0.0
    %1502 = vmatpush1.msra.mxu0 %v158
    %1503 = vmatprep.subr.mxu0 0.0
    %1504 = vmatpush2.msra.mxu0 0.0
    %1505 = vmatprep.subr.mxu0 0.0
    %1506 = vmatpush2.msra.mxu0 0.0
    %1507 = vmatprep.subr.mxu0 0.0
    %1508 = vmatpush2.msra.mxu0 0.0
    %1509 = vmatprep.subr.mxu0 0.0
    %1510 = vmatpush2.msra.mxu0 0.0
    %1511 = vmatprep.subr.mxu0 0.0
    %1512 = vmatpush2.msra.mxu0 0.0
    %1513 = vmatprep.subr.mxu0 0.0
    %1514 = vmatpush2.msra.mxu0 0.0
    %1515 = vmatprep.subr.mxu0 0.0
    %1516 = vmatpush2.msra.mxu0 0.0
    %1517 = vmatprep.subr.mxu0 0.0
    %1518 = vmatpush2.msra.mxu0 0.0
    %1519 = vmatprep.subr.mxu0 0.0
    %1520 = vmatpush2.msra.mxu0 0.0
    %1521 = vmatprep.subr.mxu0 0.0
    %1522 = vmatpush2.msra.mxu0 0.0
    %1523 = vmatprep.subr.mxu0 0.0
    %1524 = vmatpush2.msra.mxu0 0.0
    %1525 = vmatprep.subr.mxu0 0.0
    %1526 = vmatpush2.msra.mxu0 0.0
    %1527 = vmatprep.subr.mxu0 0.0
    %1528 = vmatpush2.msra.mxu0 0.0
    %1529 = vmatprep.subr.mxu0 0.0
    %1530 = vmatpush2.msra.mxu0 0.0
    %1531 = vmatprep.subr.mxu0 0.0
    %1532 = vmatpush2.msra.mxu0 0.0
    %1533 = vmatprep.subr.mxu0 0.0
    %1534 = vmatpush2.msra.mxu0 0.0
    %1535 = vmatprep.mubr.f32.mxu0 0.0
    %1536 = vmatmul.mubr.f32.gmra.mxu0 %v1469
    %v1537 = vpop.f32.mrf.mxu0
    %v1538 = vadd.f32 0.0, %v1537
    %v1539 = vpop.f32.mrf.mxu0
    %1540 = vdwg.mxu0
    %v1541 = vadd.f32 %v1467, %v1538
    %v1542 = vxor.u32 %v1541, 2147483648
    %v1543 = vmul.f32 %v1542, 1.442695
    %v1544 = vpow.pop %v1543
    %v1545 = vadd.f32 %v1544, 1.0
    %v1546 = vrcp.pop %v1545
    %v1547 = vmul.f32 1.0, %v1546
    %1548 = vst.msk [vmem:[#allocation3 + $0x7] sm:$0x1] %vm973, %v1547
    // Predicated region
    $region18: #{strnn_forward_sequence.1} parent=1 // pred_check
      _
    $region19: #{strnn_forward_sequence.1} parent=1 // pred_check_branch
      %1550 = sbr.rel (0) target = $region21
    $region20: #{strnn_forward_sequence.1} parent=1 // pred_region
      %s1552 = ssub.s32 128, 128
      %1553 = vsyncadd [#allocation4], %s1552
      %s1555 = sshll.u32 [#allocation3], 4
      %s1556 = int_to_ptr.vmem [resolvable:$true] %s1555
      %1558 = dma.vmem_to_hbm [thread:$0]  %s1556, 128, %s4, [#allocation4]
    $region21: #{strnn_forward_sequence.1} parent=1 // pred_fallthru
      _
    // Predicated region
    $region22: #{strnn_forward_sequence.1} parent=1 // pred_check
      _
    $region23: #{strnn_forward_sequence.1} parent=1 // pred_check_branch
      %1560 = sbr.rel (0) target = $region25
    $region24: #{strnn_forward_sequence.1} parent=1 // pred_region
      %1561 = dma.done [#allocation4], 128
    $region25: #{strnn_forward_sequence.1} parent=1 // pred_fallthru
      _
    %1562 = vsyncpa [#allocation4], 1

</llo_original>
